<compile_context>
chip_gen: v6e
topology: v6e:2x2x1
jax: 0.10.0
libtpu: 0.0.40
codegen_flags: <defaults>
</compile_context>

<pallas_src>
import functools

import jax
import jax.numpy as jnp
from jax.experimental import pallas as pl
from jax.experimental.pallas import tpu as pltpu


def _round_up(x, m):
    return (x + m - 1) // m * m


def _vmem_limit_bytes():
    """Per-generation scoped-VMEM budget (review item 10): ~7/8 of physical capacity
    (~56 MiB on v7x, ~112 MiB on v5e/v6e); conservative 32 MiB fallback."""
    try:
        cap = getattr(pltpu.get_tpu_info(), "vmem_capacity_bytes", None)
        if cap:
            return max(32 * 1024 * 1024, int(cap) * 7 // 8)
    except Exception:
        pass
    return 32 * 1024 * 1024


def _pick_band_rows(m_rows, vmem_limit, kp, cmid, nclsp):
    """Output-pixel rows per grid step (review items 3/4): big enough for DMA efficiency
    (128..1024), small enough for the per-generation VMEM budget, and at least two bands
    per image when possible so the auto-pipeline has DMA/compute overlap."""
    per_row = 2 * 2 * kp + 2 * 2 * nclsp + 2 * 4 * cmid   # dbl-buffered bf16 in/out + f32 acc/h
    budget = max(vmem_limit // 2, 8 * 1024 * 1024)        # leave room for weights + slack
    band = max(128, min(1024, budget // per_row // 128 * 128))
    if m_rows > 128:                                      # >= 2 bands per image when possible
        band = min(band, _round_up((m_rows + 1) // 2, 128))
    return min(band, _round_up(m_rows, 128))


def _const_spec(shape, n_grid_axes, single_buffer):
    """BlockSpec for a grid-invariant operand; single-buffered when supported (item 5)."""
    if n_grid_axes == 1:
        idx = lambda b: (0,) * len(shape)
    else:
        idx = lambda b, m: (0,) * len(shape)
    if single_buffer:
        return pl.BlockSpec(shape, idx, pipeline_mode=pl.Buffered(1))
    return pl.BlockSpec(shape, idx)


# --------------------------------------------------------------------------------------
# Path A: small Cin (9*Cin <= 128) — taps folded into K, one matmul per band.
# --------------------------------------------------------------------------------------
def _aux_kernel_packed(x_ref, w1_ref, shift_ref, w2_ref, b2_ref, o_ref):
    # x_ref:     (1, band, Kp)   bf16  tap-packed activations (one band of one image)
    # w1_ref:    (Kp, Cmid)      bf16  tap-packed conv1 weights (BN scale folded in)
    # shift_ref: (1, Cmid)       f32   folded BN shift (includes conv1 bias)
    # w2_ref:    (Cmid, 128)     bf16  1x1 conv weight, classes zero-padded to 128 lanes
    # b2_ref:    (1, 128)        f32
    # o_ref:     (1, band, 128)  bf16
    acc = jnp.dot(x_ref[0], w1_ref[...], preferred_element_type=jnp.float32)
    h = jnp.maximum(acc + shift_ref[...], 0.0)            # f32 epilogue (v5e-safe)
    # TODO(synk): Dropout2d(0.1) is identity in eval mode; training-mode channel dropout not emitted.
    out = jnp.dot(h.astype(jnp.bfloat16), w2_ref[...], preferred_element_type=jnp.float32)
    o_ref[0] = (out + b2_ref[...]).astype(o_ref.dtype)


def _forward_packed(x_nchw, params):
    w1, b1 = params["w1"], params["b1"]
    gamma, beta = params["gamma"], params["beta"]
    rm, rv, eps = params["running_mean"], params["running_var"], params["eps"]
    w2, b2 = params["w2"], params["b2"]

    B, Cin, H, W = x_nchw.shape
    Cmid = w1.shape[0]
    Ncls = w2.shape[0]
    Kp = _round_up(9 * Cin, 128)        # == round_up(Cin,128) when 9*Cin<=128: same HBM bytes
    Nclsp = _round_up(Ncls, 128)        # lane-dense output; never pad beyond 128 (item 9)
    M = H * W

    vmem_limit = _vmem_limit_bytes()
    band = _pick_band_rows(M, vmem_limit, Kp, Cmid, Nclsp)
    m_pad = _round_up(M, band)
    nbands = m_pad // band

    # ---- activations: NCHW -> NHWC -> tap-packed (h*W+w, 9*Cin) slab, bf16 ----
    # TODO(synk): in production accept NHWC bf16 (or the packed slab) from the producer so this
    # re-layout (an extra HBM round trip over the activations) is fused upstream (item 8).
    x = jnp.transpose(x_nchw, (0, 2, 3, 1))                        # (B, H, W, Cin)
    xp = jnp.pad(x, ((0, 0), (1, 1), (1, 1), (0, 0)))              # (B, H+2, W+2, Cin)
    taps = [jax.lax.slice(xp, (0, dy, dx, 0), (B, dy + H, dx + W, Cin))
            for dy in range(3) for dx in range(3)]
    packed = jnp.concatenate(taps, axis=-1)                        # (B, H, W, 9*Cin)
    packed = jnp.pad(packed, ((0, 0), (0, 0), (0, 0), (0, Kp - 9 * Cin)))
    packed = packed.reshape(B, M, Kp)
    packed = jnp.pad(packed, ((0, 0), (0, m_pad - M), (0, 0))).astype(jnp.bfloat16)

    # ---- weights: fold BN scale into conv1, tap-pack (one-time per checkpoint) ----
    scale = gamma / jnp.sqrt(rv + eps)
    shift = (beta + (b1 - rm) * scale).reshape(1, Cmid).astype(jnp.float32)
    w1_p = (jnp.transpose(w1, (2, 3, 1, 0)) * scale).reshape(9 * Cin, Cmid)   # lane = t*Cin + c
    w1_p = jnp.pad(w1_p, ((0, Kp - 9 * Cin), (0, 0))).astype(jnp.bfloat16)
    w2_m = jnp.pad(w2.reshape(Ncls, Cmid).T, ((0, 0), (0, Nclsp - Ncls))).astype(jnp.bfloat16)
    b2_r = jnp.pad(b2.reshape(1, Ncls), ((0, 0), (0, Nclsp - Ncls))).astype(jnp.float32)

    def call(single_buffer):
        wspec = lambda shape: _const_spec(shape, 2, single_buffer)
        return pl.pallas_call(
            _aux_kernel_packed,
            out_shape=jax.ShapeDtypeStruct((B, m_pad, Nclsp), jnp.bfloat16),
            grid_spec=pltpu.PrefetchScalarGridSpec(
                num_scalar_prefetch=0,
                grid=(B, nbands),                              # image x H-band (items 3/4)
                in_specs=[
                    pl.BlockSpec((1, band, Kp), lambda b, m: (b, m, 0)),
                    wspec((Kp, Cmid)),
                    wspec((1, Cmid)),
                    wspec((Cmid, Nclsp)),
                    wspec((1, Nclsp)),
                ],
                out_specs=pl.BlockSpec((1, band, Nclsp), lambda b, m: (b, m, 0)),
            ),
            compiler_params=pltpu.CompilerParams(
                dimension_semantics=("parallel", "parallel"),
                vmem_limit_bytes=vmem_limit,
            ),
        )(packed, w1_p, shift, w2_m, b2_r)

    try:
        out_flat = call(True)                  # single-buffered grid-invariant weights
    except Exception:                          # pragma: no cover — Buffered(1) unsupported
        out_flat = call(False)

    out = out_flat[:, :M, :Ncls].reshape(B, H, W, Ncls)            # bf16 slice/reshape (item 7)
    return jnp.transpose(out, (0, 3, 1, 2)).astype(jnp.float32)    # NCHW f32 (module dtype)


# --------------------------------------------------------------------------------------
# Path B: general Cin (9*Cin > 128) — 9-tap implicit GEMM over an aligned flat slab.
# --------------------------------------------------------------------------------------
def _aux_kernel_slab(x_ref, w1_ref, shift_ref, w2_ref, b2_ref, o_ref, x1_scr, x2_scr,
                     *, w_p, n_acc):
    # x_ref:     (1, l_pad, Cin_p)     bf16  one zero-padded image, flattened over (H+2, w_p)
    # w1_ref:    (9, Cin_p, Cmid)      bf16  conv1 taps (BN scale folded), tap t = dy*3+dx
    # shift_ref: (1, Cmid)             f32
    # w2_ref:    (Cmid, 128)           bf16
    # b2_ref:    (1, 128)              f32
    # o_ref:     (1, n_acc, 128)       bf16
    # x*_scr:    (n_acc+2*w_p, Cin_p)  bf16  staged dx-shifted copies (review item 2)
    x0 = x_ref[0]
    cin_p = x0.shape[1]
    cmid = w1_ref.shape[2]
    l_stage = x1_scr.shape[0]

    # Stage dx = 1, 2 shifts ONCE (two retiled copies) so every matmul LHS below is a
    # sublane-aligned view (w_p is a multiple of 16 -> dy*w_p offsets are aligned).
    x1_scr[...] = jax.lax.slice(x0, (1, 0), (1 + l_stage, cin_p))
    x2_scr[...] = jax.lax.slice(x0, (2, 0), (2 + l_stage, cin_p))

    acc = jnp.zeros((n_acc, cmid), jnp.float32)
    for t in range(9):
        dy, dx = divmod(t, 3)
        start = dy * w_p                                   # static, multiple of 16
        if dx == 0:
            lhs = jax.lax.slice(x0, (start, 0), (start + n_acc, cin_p))
        elif dx == 1:
            lhs = x1_scr[pl.ds(start, n_acc), :]
        else:
            lhs = x2_scr[pl.ds(start, n_acc), :]
        acc = acc + jnp.dot(lhs, w1_ref[t], preferred_element_type=jnp.float32)
    # TODO(synk): for very large H/W or Cin, add an H-band grid axis with halo-aware manual
    # DMA and tile M inside the band (review items 3/6); unnecessary at these sizes.

    h = jnp.maximum(acc + shift_ref[...], 0.0)
    out = jnp.dot(h.astype(jnp.bfloat16), w2_ref[...], preferred_element_type=jnp.float32)
    o_ref[0] = (out + b2_ref[...]).astype(o_ref.dtype)


def _forward_slab(x_nchw, params):
    w1, b1 = params["w1"], params["b1"]
    gamma, beta = params["gamma"], params["beta"]
    rm, rv, eps = params["running_mean"], params["running_var"], params["eps"]
    w2, b2 = params["w2"], params["b2"]

    B, Cin, H, W = x_nchw.shape
    Cmid = w1.shape[0]
    Ncls = w2.shape[0]
    Cin_p = _round_up(Cin, 128)
    Nclsp = _round_up(Ncls, 128)
    w_p = _round_up(W + 2, 16)               # flat row stride, sublane-aligned (item 2)
    n_acc = H * w_p                           # output/accumulator rows per image
    l_pad = _round_up((H + 2) * w_p + 2, 16)
    l_stage = n_acc + 2 * w_p

    # ---- activations: NHWC, spatial pad (1 left / w_p-W-1 right), channel pad, flatten ----
    x = jnp.transpose(x_nchw, (0, 2, 3, 1))
    x = jnp.pad(x, ((0, 0), (1, 1), (1, w_p - W - 1), (0, Cin_p - Cin)))   # (B, H+2, w_p, Cin_p)
    x = x.reshape(B, (H + 2) * w_p, Cin_p)
    x = jnp.pad(x, ((0, 0), (0, l_pad - (H + 2) * w_p), (0, 0))).astype(jnp.bfloat16)

    # ---- weights (one-time per checkpoint) ----
    scale = gamma / jnp.sqrt(rv + eps)
    shift = (beta + (b1 - rm) * scale).reshape(1, Cmid).astype(jnp.float32)
    w1_t = jnp.transpose(w1, (2, 3, 1, 0)) * scale                         # (3,3,Cin,Cmid)
    w1_t = jnp.pad(w1_t, ((0, 0), (0, 0), (0, Cin_p - Cin), (0, 0)))
    w1_taps = w1_t.reshape(9, Cin_p, Cmid).astype(jnp.bfloat16)
    w2_m = jnp.pad(w2.reshape(Ncls, Cmid).T, ((0, 0), (0, Nclsp - Ncls))).astype(jnp.bfloat16)
    b2_r = jnp.pad(b2.reshape(1, Ncls), ((0, 0), (0, Nclsp - Ncls))).astype(jnp.float32)

    kernel = functools.partial(_aux_kernel_slab, w_p=w_p, n_acc=n_acc)
    vmem_limit = _vmem_limit_bytes()

    def call(single_buffer):
        wspec = lambda shape: _const_spec(shape, 1, single_buffer)
        return pl.pallas_call(
            kernel,
            out_shape=jax.ShapeDtypeStruct((B, n_acc, Nclsp), jnp.bfloat16),
            grid_spec=pltpu.PrefetchScalarGridSpec(
                num_scalar_prefetch=0,
                grid=(B,),
                in_specs=[
                    pl.BlockSpec((1, l_pad, Cin_p), lambda b: (b, 0, 0)),
                    wspec((9, Cin_p, Cmid)),
                    wspec((1, Cmid)),
                    wspec((Cmid, Nclsp)),
                    wspec((1, Nclsp)),
                ],
                out_specs=pl.BlockSpec((1, n_acc, Nclsp), lambda b: (b, 0, 0)),
                scratch_shapes=[
                    pltpu.VMEM((l_stage, Cin_p), jnp.bfloat16),
                    pltpu.VMEM((l_stage, Cin_p), jnp.bfloat16),
                ],
            ),
            compiler_params=pltpu.CompilerParams(
                dimension_semantics=("parallel",),
                vmem_limit_bytes=vmem_limit,
            ),
        )(x, w1_taps, shift, w2_m, b2_r)

    try:
        out_flat = call(True)
    except Exception:                          # pragma: no cover — Buffered(1) unsupported
        out_flat = call(False)

    out = out_flat.reshape(B, H, w_p, Nclsp)[:, :, :W, :Ncls]      # bf16 slice/reshape
    return jnp.transpose(out, (0, 3, 1, 2)).astype(jnp.float32)


def aux_module_forward(x_nchw, params):
    """Eval-mode Aux_Module forward: (B, Cin, H, W) f32 -> (B, num_classes, H, W) f32."""
    cin = x_nchw.shape[1]
    if 9 * cin <= 128:       # tap-packing is free in HBM bytes vs. pad-Cin-to-128
        return _forward_packed(x_nchw, params)
    return _forward_slab(x_nchw, params)


# --------------------------------------------------------------------------------------
# Reference + test harness
# --------------------------------------------------------------------------------------
def _reference(x_nchw, params):
    """Pure-JAX f32 reference (eval mode)."""
    w1, b1 = params["w1"], params["b1"]
    gamma, beta = params["gamma"], params["beta"]
    rm, rv, eps = params["running_mean"], params["running_var"], params["eps"]
    w2, b2 = params["w2"], params["b2"]
    y = jax.lax.conv_general_dilated(
        x_nchw, w1, window_strides=(1, 1), padding=((1, 1), (1, 1)),
        dimension_numbers=("NCHW", "OIHW", "NCHW"))
    y = y + b1[None, :, None, None]
    y = (y - rm[None, :, None, None]) / jnp.sqrt(rv[None, :, None, None] + eps)
    y = y * gamma[None, :, None, None] + beta[None, :, None, None]
    y = jnp.maximum(y, 0.0)
    y = jax.lax.conv_general_dilated(
        y, w2, window_strides=(1, 1), padding="VALID",
        dimension_numbers=("NCHW", "OIHW", "NCHW"))
    return y + b2[None, :, None, None]


def make_params(key, in_planes, num_classes=19, cmid=256):
    ks = jax.random.split(key, 8)
    w1_scale = 0.3 / (3.0 * in_planes ** 0.5)     # keep conv1 output O(1) for any in_planes
    return {
        "w1": jax.random.normal(ks[0], (cmid, in_planes, 3, 3), jnp.float32) * w1_scale,
        "b1": jax.random.normal(ks[1], (cmid,), jnp.float32) * 0.05,
        "gamma": 1.0 + 0.1 * jax.random.normal(ks[2], (cmid,), jnp.float32),
        "beta": 0.1 * jax.random.normal(ks[3], (cmid,), jnp.float32),
        "running_mean": 0.1 * jax.random.normal(ks[4], (cmid,), jnp.float32),
        "running_var": jnp.abs(1.0 + 0.1 * jax.random.normal(ks[5], (cmid,), jnp.float32)),
        "eps": jnp.float32(1e-5),
        "w2": jax.random.normal(ks[6], (num_classes, cmid, 1, 1), jnp.float32) * 0.05,
        "b2": jax.random.normal(ks[7], (num_classes,), jnp.float32) * 0.05,
    }


if __name__ == "__main__":
    key = jax.random.PRNGKey(0)
    k1, k2, k3, k4 = jax.random.split(key, 4)

    # Case 1 — nominal small test (Cin=4): tap-packed single-matmul path, grid (B=2, bands=2).
    B, Cin, H, W = 2, 4, 16, 16
    x = jax.random.normal(k1, (B, Cin, H, W), jnp.float32)
    params = make_params(k2, Cin, num_classes=19)
    out = jax.block_until_ready(aux_module_forward(x, params))
    ref = _reference(x, params)
    assert out.shape == (B, 19, H, W)
    # bf16 matmul inputs + bf16 output slab with f32 accumulation -> bf16-level tolerance.
    assert jnp.allclose(out, ref, atol=3e-2, rtol=3e-2), "packed-path mismatch vs reference"

    # Case 2 — larger Cin (9*Cin > 128): general aligned-slab path.
    Cin2 = 24
    x2 = jax.random.normal(k3, (B, Cin2, H, W), jnp.float32)
    params2 = make_params(k4, Cin2, num_classes=19)
    out2 = jax.block_until_ready(aux_module_forward(x2, params2))
    ref2 = _reference(x2, params2)
    assert out2.shape == (B, 19, H, W)
    assert jnp.allclose(out2, ref2, atol=3e-2, rtol=3e-2), "slab-path mismatch vs reference"

    print("KERNEL_OK")
</pallas_src>

<mosaic_0001>
module attributes {stable_mosaic.version = 11 : i64} {
  func.func @_aux_kernel_packed(%arg0: i32, %arg1: i32, %arg2: memref<1x128x128xbf16, #tpu.memory_space<vmem>>, %arg3: memref<128x256xbf16, #tpu.memory_space<vmem>>, %arg4: memref<1x256xf32, #tpu.memory_space<vmem>>, %arg5: memref<256x128xbf16, #tpu.memory_space<vmem>>, %arg6: memref<1x128xf32, #tpu.memory_space<vmem>>, %arg7: memref<1x128x128xbf16, #tpu.memory_space<vmem>>) attributes {dimension_semantics = [#tpu.dimension_semantics<parallel>, #tpu.dimension_semantics<parallel>], iteration_bounds = array<i64: 2, 2>, scalar_prefetch = 0 : i64, scratch_operands = 0 : i64, tpu.core_type = #tpu.core_type<tc>, window_params = [{transform_indices = @transform_0, window_bounds = array<i64: 1, 128, 128>}, {pipeline_mode = #tpu.pipeline_mode<synchronous>, transform_indices = @transform_1, window_bounds = array<i64: 128, 256>}, {pipeline_mode = #tpu.pipeline_mode<synchronous>, transform_indices = @transform_2, window_bounds = array<i64: 1, 256>}, {pipeline_mode = #tpu.pipeline_mode<synchronous>, transform_indices = @transform_3, window_bounds = array<i64: 256, 128>}, {pipeline_mode = #tpu.pipeline_mode<synchronous>, transform_indices = @transform_4, window_bounds = array<i64: 1, 128>}, {transform_indices = @transform_5, window_bounds = array<i64: 1, 128, 128>}]} {
    %c0 = arith.constant 0 : index
    %c0_0 = arith.constant 0 : index
    %c0_1 = arith.constant 0 : index
    %0 = vector.load %arg2[%c0, %c0_0, %c0_1] : memref<1x128x128xbf16, #tpu.memory_space<vmem>>, vector<1x128x128xbf16>
    %1 = vector.shape_cast %0 : vector<1x128x128xbf16> to vector<128x128xbf16>
    %c0_2 = arith.constant 0 : index
    %c0_3 = arith.constant 0 : index
    %2 = vector.load %arg3[%c0_2, %c0_3] : memref<128x256xbf16, #tpu.memory_space<vmem>>, vector<128x256xbf16>
    %cst = arith.constant dense<0.000000e+00> : vector<128x256xf32>
    %3 = tpu.matmul %1, %2, %cst {dimension_numbers = #tpu.dot_dimension_numbers<[1], [0], [0], [1], [0, 0, 1, 1], [], []>} : vector<128x128xbf16>, vector<128x256xbf16>, vector<128x256xf32> -> vector<128x256xf32>
    %c0_4 = arith.constant 0 : index
    %c0_5 = arith.constant 0 : index
    %4 = vector.load %arg4[%c0_4, %c0_5] : memref<1x256xf32, #tpu.memory_space<vmem>>, vector<1x256xf32>
    %5 = vector.broadcast %4 : vector<1x256xf32> to vector<128x256xf32>
    %6 = arith.addf %3, %5 : vector<128x256xf32>
    %cst_6 = arith.constant 0.000000e+00 : f32
    %7 = vector.broadcast %cst_6 : f32 to vector<128x256xf32>
    %8 = arith.maximumf %6, %7 : vector<128x256xf32>
    %9 = arith.truncf %8 : vector<128x256xf32> to vector<128x256xbf16>
    %c0_7 = arith.constant 0 : index
    %c0_8 = arith.constant 0 : index
    %10 = vector.load %arg5[%c0_7, %c0_8] : memref<256x128xbf16, #tpu.memory_space<vmem>>, vector<256x128xbf16>
    %cst_9 = arith.constant dense<0.000000e+00> : vector<128x128xf32>
    %11 = tpu.matmul %9, %10, %cst_9 {dimension_numbers = #tpu.dot_dimension_numbers<[1], [0], [0], [1], [0, 0, 1, 1], [], []>} : vector<128x256xbf16>, vector<256x128xbf16>, vector<128x128xf32> -> vector<128x128xf32>
    %c0_10 = arith.constant 0 : index
    %c0_11 = arith.constant 0 : index
    %12 = vector.load %arg6[%c0_10, %c0_11] : memref<1x128xf32, #tpu.memory_space<vmem>>, vector<1x128xf32>
    %13 = vector.broadcast %12 : vector<1x128xf32> to vector<128x128xf32>
    %14 = arith.addf %11, %13 : vector<128x128xf32>
    %15 = arith.truncf %14 : vector<128x128xf32> to vector<128x128xbf16>
    %c0_12 = arith.constant 0 : index
    %c0_13 = arith.constant 0 : index
    %c0_14 = arith.constant 0 : index
    %16 = vector.load %arg7[%c0_12, %c0_13, %c0_14] : memref<1x128x128xbf16, #tpu.memory_space<vmem>>, vector<1x128x128xbf16>
    %17 = vector.shape_cast %16 : vector<1x128x128xbf16> to vector<128x128xbf16>
    %18 = vector.shape_cast %15 : vector<128x128xbf16> to vector<1x128x128xbf16>
    tpu.vector_store %arg7[%c0_12, %c0_13, %c0_14], %18 {strides = array<i32>} : memref<1x128x128xbf16, #tpu.memory_space<vmem>>, vector<1x128x128xbf16>,
    return
  }
  func.func @transform_0(%arg0: i32, %arg1: i32) -> (i32, i32, i32) {
    %c0_i32 = arith.constant 0 : i32
    %c0_i32_0 = arith.constant 0 : i32
    return %arg0, %arg1, %c0_i32 : i32, i32, i32
  }
  func.func @transform_1(%arg0: i32, %arg1: i32) -> (i32, i32) {
    %c0_i32 = arith.constant 0 : i32
    %c0_i32_0 = arith.constant 0 : i32
    %c0_i32_1 = arith.constant 0 : i32
    return %c0_i32, %c0_i32_0 : i32, i32
  }
  func.func @transform_2(%arg0: i32, %arg1: i32) -> (i32, i32) {
    %c0_i32 = arith.constant 0 : i32
    %c0_i32_0 = arith.constant 0 : i32
    %c0_i32_1 = arith.constant 0 : i32
    return %c0_i32, %c0_i32_0 : i32, i32
  }
  func.func @transform_3(%arg0: i32, %arg1: i32) -> (i32, i32) {
    %c0_i32 = arith.constant 0 : i32
    %c0_i32_0 = arith.constant 0 : i32
    %c0_i32_1 = arith.constant 0 : i32
    return %c0_i32, %c0_i32_0 : i32, i32
  }
  func.func @transform_4(%arg0: i32, %arg1: i32) -> (i32, i32) {
    %c0_i32 = arith.constant 0 : i32
    %c0_i32_0 = arith.constant 0 : i32
    %c0_i32_1 = arith.constant 0 : i32
    return %c0_i32, %c0_i32_0 : i32, i32
  }
  func.func @transform_5(%arg0: i32, %arg1: i32) -> (i32, i32, i32) {
    %c0_i32 = arith.constant 0 : i32
    %c0_i32_0 = arith.constant 0 : i32
    return %arg0, %arg1, %c0_i32 : i32, i32, i32
  }
}

module attributes {stable_mosaic.version = 11 : i64} {
  func.func @_aux_kernel_packed(%arg0: i32, %arg1: i32, %arg2: memref<1x128x128xbf16, #tpu.memory_space<vmem>>, %arg3: memref<128x256xbf16, #tpu.memory_space<vmem>>, %arg4: memref<1x256xf32, #tpu.memory_space<vmem>>, %arg5: memref<256x128xbf16, #tpu.memory_space<vmem>>, %arg6: memref<1x128xf32, #tpu.memory_space<vmem>>, %arg7: memref<1x128x128xbf16, #tpu.memory_space<vmem>>) attributes {dimension_semantics = [#tpu.dimension_semantics<parallel>, #tpu.dimension_semantics<parallel>], iteration_bounds = array<i64: 2, 2>, scalar_prefetch = 0 : i64, scratch_operands = 0 : i64, tpu.core_type = #tpu.core_type<tc>, window_params = [{transform_indices = @transform_0, window_bounds = array<i64: 1, 128, 128>}, {pipeline_mode = #tpu.pipeline_mode<synchronous>, transform_indices = @transform_1, window_bounds = array<i64: 128, 256>}, {pipeline_mode = #tpu.pipeline_mode<synchronous>, transform_indices = @transform_2, window_bounds = array<i64: 1, 256>}, {pipeline_mode = #tpu.pipeline_mode<synchronous>, transform_indices = @transform_3, window_bounds = array<i64: 256, 128>}, {pipeline_mode = #tpu.pipeline_mode<synchronous>, transform_indices = @transform_4, window_bounds = array<i64: 1, 128>}, {transform_indices = @transform_5, window_bounds = array<i64: 1, 128, 128>}]} {
    %c0 = arith.constant 0 : index
    %c0_0 = arith.constant 0 : index
    %c0_1 = arith.constant 0 : index
    %0 = vector.load %arg2[%c0, %c0_0, %c0_1] : memref<1x128x128xbf16, #tpu.memory_space<vmem>>, vector<1x128x128xbf16>
    %1 = vector.shape_cast %0 : vector<1x128x128xbf16> to vector<128x128xbf16>
    %c0_2 = arith.constant 0 : index
    %c0_3 = arith.constant 0 : index
    %2 = vector.load %arg3[%c0_2, %c0_3] : memref<128x256xbf16, #tpu.memory_space<vmem>>, vector<128x256xbf16>
    %cst = arith.constant dense<0.000000e+00> : vector<128x256xf32>
    %3 = tpu.matmul %1, %2, %cst {dimension_numbers = #tpu.dot_dimension_numbers<[1], [0], [0], [1], [0, 0, 1, 1], [], []>} : vector<128x128xbf16>, vector<128x256xbf16>, vector<128x256xf32> -> vector<128x256xf32>
    %c0_4 = arith.constant 0 : index
    %c0_5 = arith.constant 0 : index
    %4 = vector.load %arg4[%c0_4, %c0_5] : memref<1x256xf32, #tpu.memory_space<vmem>>, vector<1x256xf32>
    %5 = vector.broadcast %4 : vector<1x256xf32> to vector<128x256xf32>
    %6 = arith.addf %3, %5 : vector<128x256xf32>
    %cst_6 = arith.constant 0.000000e+00 : f32
    %7 = vector.broadcast %cst_6 : f32 to vector<128x256xf32>
    %8 = arith.maximumf %6, %7 : vector<128x256xf32>
    %9 = arith.truncf %8 : vector<128x256xf32> to vector<128x256xbf16>
    %c0_7 = arith.constant 0 : index
    %c0_8 = arith.constant 0 : index
    %10 = vector.load %arg5[%c0_7, %c0_8] : memref<256x128xbf16, #tpu.memory_space<vmem>>, vector<256x128xbf16>
    %cst_9 = arith.constant dense<0.000000e+00> : vector<128x128xf32>
    %11 = tpu.matmul %9, %10, %cst_9 {dimension_numbers = #tpu.dot_dimension_numbers<[1], [0], [0], [1], [0, 0, 1, 1], [], []>} : vector<128x256xbf16>, vector<256x128xbf16>, vector<128x128xf32> -> vector<128x128xf32>
    %c0_10 = arith.constant 0 : index
    %c0_11 = arith.constant 0 : index
    %12 = vector.load %arg6[%c0_10, %c0_11] : memref<1x128xf32, #tpu.memory_space<vmem>>, vector<1x128xf32>
    %13 = vector.broadcast %12 : vector<1x128xf32> to vector<128x128xf32>
    %14 = arith.addf %11, %13 : vector<128x128xf32>
    %15 = arith.truncf %14 : vector<128x128xf32> to vector<128x128xbf16>
    %c0_12 = arith.constant 0 : index
    %c0_13 = arith.constant 0 : index
    %c0_14 = arith.constant 0 : index
    %16 = vector.load %arg7[%c0_12, %c0_13, %c0_14] : memref<1x128x128xbf16, #tpu.memory_space<vmem>>, vector<1x128x128xbf16>
    %17 = vector.shape_cast %16 : vector<1x128x128xbf16> to vector<128x128xbf16>
    %18 = vector.shape_cast %15 : vector<128x128xbf16> to vector<1x128x128xbf16>
    tpu.vector_store %arg7[%c0_12, %c0_13, %c0_14], %18 {strides = array<i32>} : memref<1x128x128xbf16, #tpu.memory_space<vmem>>, vector<1x128x128xbf16>,
    return
  }
  func.func @transform_0(%arg0: i32, %arg1: i32) -> (i32, i32, i32) {
    %c0_i32 = arith.constant 0 : i32
    %c0_i32_0 = arith.constant 0 : i32
    return %arg0, %arg1, %c0_i32 : i32, i32, i32
  }
  func.func @transform_1(%arg0: i32, %arg1: i32) -> (i32, i32) {
    %c0_i32 = arith.constant 0 : i32
    %c0_i32_0 = arith.constant 0 : i32
    %c0_i32_1 = arith.constant 0 : i32
    return %c0_i32, %c0_i32_0 : i32, i32
  }
  func.func @transform_2(%arg0: i32, %arg1: i32) -> (i32, i32) {
    %c0_i32 = arith.constant 0 : i32
    %c0_i32_0 = arith.constant 0 : i32
    %c0_i32_1 = arith.constant 0 : i32
    return %c0_i32, %c0_i32_0 : i32, i32
  }
  func.func @transform_3(%arg0: i32, %arg1: i32) -> (i32, i32) {
    %c0_i32 = arith.constant 0 : i32
    %c0_i32_0 = arith.constant 0 : i32
    %c0_i32_1 = arith.constant 0 : i32
    return %c0_i32, %c0_i32_0 : i32, i32
  }
  func.func @transform_4(%arg0: i32, %arg1: i32) -> (i32, i32) {
    %c0_i32 = arith.constant 0 : i32
    %c0_i32_0 = arith.constant 0 : i32
    %c0_i32_1 = arith.constant 0 : i32
    return %c0_i32, %c0_i32_0 : i32, i32
  }
  func.func @transform_5(%arg0: i32, %arg1: i32) -> (i32, i32, i32) {
    %c0_i32 = arith.constant 0 : i32
    %c0_i32_0 = arith.constant 0 : i32
    return %arg0, %arg1, %c0_i32 : i32, i32, i32
  }
}

</mosaic_0001>

<llo_original>
// kernel: tpu_custom_call.1
$region0: #{tpu_custom_call.1}
  #allocation0 [shape = 'u32[]', space=smem, size = 0x4, offset = 0x4, fixed_abs, tag = 'smem constant byte address 0x4 - core index']
  #allocation1 [shape = 'u32[144,128]{1,0:T(1,128)}', space=vmem, size = 0x12000, scoped, tag = 'internal scratch']
  %s0 = inlined_call_operand.hbm [shape: bf16[2,256,128], index: 0, kind: input, shape index: {}]
  %s1 = inlined_call_operand.hbm [shape: bf16[128,256], index: 1, kind: input, shape index: {}]
  %s2 = inlined_call_operand.vmem [shape: f32[1,256], index: 2, kind: input, shape index: {}]
  %s3 = inlined_call_operand.hbm [shape: bf16[256,128], index: 3, kind: input, shape index: {}]
  %s4 = inlined_call_operand.vmem [shape: f32[1,128], index: 4, kind: input, shape index: {}]
  %s5 = inlined_call_operand.hbm [shape: bf16[2,256,128], index: 5, kind: output, shape index: {}]
  %s6 = sld [smem:[#allocation0]]
  $region65: #{tpu_custom_call.1} parent=0
    _
  %s8 = ssub.s32 1, %s6
  %s9 = scalar_select 0, %s8, %s6
  $region1: #{tpu_custom_call.1} parent=0
    #allocation2 [shape = 'u8[65536]{0}', space=vmem, size = 0x10000, scoped, tag = 'input window, operand 0']
    #allocation3 [shape = 's32[2]{0}', space=sflag, size = 0x8, scoped, tag = 'scoped memory for tpu_custom_call.1']
    #allocation4 [shape = 's32[2]{0}', space=sflag, size = 0x8, scoped, tag = 'scoped memory for tpu_custom_call.1']
    #allocation5 [shape = 'u8[65536]{0}', space=vmem, size = 0x10000, scoped, tag = 'input window, operand 1, single buffered']
    #allocation6 [shape = 's32[1]{0}', space=sflag, size = 0x4, scoped, tag = 'scoped memory for tpu_custom_call.1']
    #allocation7 [shape = 'u8[65536]{0}', space=vmem, size = 0x10000, scoped, tag = 'input window, operand 3, single buffered']
    #allocation8 [shape = 'u8[65536]{0}', space=vmem, size = 0x10000, scoped, tag = 'output window, operand 0']
    %10 = vsyncpa [#allocation3], 0
    %s11 = scalar_lea.sflag [#allocation3], 1
    %12 = vsyncpa %s11, 0
    %13 = vsyncpa [#allocation6], 0
    %14 = vsyncpa [#allocation4], 0
    %s15 = scalar_lea.sflag [#allocation4], 1
    %16 = vsyncpa %s15, 0
    loop: start=0, step=1, limit=6
    $region2: #{tpu_custom_call.1} parent=1 // loop_pre_header
      _
    $region3: #{tpu_custom_call.1} parent=1 // loop_header
      %s18 = sphi 0, %s22
      %p19 = scmp.ge.s32.totalorder %s18, 6
      %s25 = sphi 0, %s37
      %s26 = sphi 0, %s33
      %s27 = sphi 0, %s25
      %s28 = sphi 0, %s26
      %s29 = sphi 0, %s27
      %s30 = sphi 0, %s28
      %s42 = sphi 0, %s44
      %s45 = sphi 0, %s42
      %s46 = sphi 0, %s45
      %s62 = sphi 0, %s46
      %s66 = sphi 0, %s66
      %s68 = sphi 0, %s66
      %s69 = sphi 0, %s68
      %s83 = sphi 0, %s69
      %s87 = sphi 0, %s87
      %s89 = sphi 0, %s87
      %s90 = sphi 0, %s89
      %s104 = sphi 0, %s90
      %s108 = sphi 0, %s108
      %s110 = sphi 0, %s108
      %s111 = sphi 0, %s110
      %s125 = sphi 0, %s111
      %s129 = sphi 0, %s129
      %s131 = sphi 0, %s129
      %s132 = sphi 0, %s131
      %s146 = sphi 0, %s132
      %s154 = sphi 0, %s156
      %s157 = sphi 0, %s154
      %s158 = sphi 0, %s157
      %s174 = sphi 0, %s158
    $region4: #{tpu_custom_call.1} parent=1 // loop_header_branch
      %21 = sbr.rel (%p19) target = $region8
    $region5: #{tpu_custom_call.1} parent=1 // loop_body
      %s23 = ssub.s32 %s18, 1
      %s24 = ssub.s32 %s18, 2
      %s31 = sadd.s32 1, %s26
      %p32 = scmp.ge.s32.totalorder %s31, 2
      %s33 = scalar_select %p32, 0, %s31
      %s34 = sadd.s32 1, %s25
      %s35 = scalar_select %p32, %s34, %s25
      %p36 = scmp.ge.s32.totalorder %s35, 2
      %s37 = scalar_select %p36, 0, %s35
      %s38 = ssub.s32 %s25, %s37
      %s39 = ssub.s32 %s26, %s33
      %s40 = sor.u32 %s38, %s39
      %p41 = scmp.eq.s32.totalorder %s40, 0
      %s43 = sadd.s32 %s42, 1
      %s44 = scalar_select %p41, %s42, %s43
      %p47 = pneg %p41
      %p48 = scmp.eq.s32.totalorder %s18, 3
      %p49 = por %p47, %p48
      %p50 = scmp.ne.s32.totalorder %s42, %s45
      %p51 = scmp.eq.s32.totalorder %s18, 0
      %p52 = por %p50, %p51
      %p53 = scmp.ne.s32.totalorder %s42, %s45
      %p54 = scmp.eq.s32.totalorder %s23, 3
      %p55 = por %p53, %p54
      %p56 = scmp.ne.s32.totalorder %s45, %s46
      %p57 = scmp.eq.s32.totalorder %s23, 0
      %p58 = por %p56, %p57
      %p59 = scmp.ne.s32.totalorder %s45, %s46
      %p60 = scmp.eq.s32.totalorder %s24, 3
      %p61 = por %p59, %p60
      %p63 = scmp.ne.s32.totalorder %s46, %s62
      %p64 = scmp.eq.s32.totalorder %s24, 0
      %p65 = por %p63, %p64
      %s67 = sadd.s32 %s66, 1
      %p70 = scmp.eq.s32.totalorder %s18, 3
      %p71 = scmp.ne.s32.totalorder %s66, %s68
      %p72 = scmp.eq.s32.totalorder %s18, 0
      %p73 = por %p71, %p72
      %p74 = scmp.ne.s32.totalorder %s66, %s68
      %p75 = scmp.eq.s32.totalorder %s23, 3
      %p76 = por %p74, %p75
      %p77 = scmp.ne.s32.totalorder %s68, %s69
      %p78 = scmp.eq.s32.totalorder %s23, 0
      %p79 = por %p77, %p78
      %p80 = scmp.ne.s32.totalorder %s68, %s69
      %p81 = scmp.eq.s32.totalorder %s24, 3
      %p82 = por %p80, %p81
      %p84 = scmp.ne.s32.totalorder %s69, %s83
      %p85 = scmp.eq.s32.totalorder %s24, 0
      %p86 = por %p84, %p85
      %s88 = sadd.s32 %s87, 1
      %p91 = scmp.eq.s32.totalorder %s18, 3
      %p92 = scmp.ne.s32.totalorder %s87, %s89
      %p93 = scmp.eq.s32.totalorder %s18, 0
      %p94 = por %p92, %p93
      %p95 = scmp.ne.s32.totalorder %s87, %s89
      %p96 = scmp.eq.s32.totalorder %s23, 3
      %p97 = por %p95, %p96
      %p98 = scmp.ne.s32.totalorder %s89, %s90
      %p99 = scmp.eq.s32.totalorder %s23, 0
      %p100 = por %p98, %p99
      %p101 = scmp.ne.s32.totalorder %s89, %s90
      %p102 = scmp.eq.s32.totalorder %s24, 3
      %p103 = por %p101, %p102
      %p105 = scmp.ne.s32.totalorder %s90, %s104
      %p106 = scmp.eq.s32.totalorder %s24, 0
      %p107 = por %p105, %p106
      %s109 = sadd.s32 %s108, 1
      %p112 = scmp.eq.s32.totalorder %s18, 3
      %p113 = scmp.ne.s32.totalorder %s108, %s110
      %p114 = scmp.eq.s32.totalorder %s18, 0
      %p115 = por %p113, %p114
      %p116 = scmp.ne.s32.totalorder %s108, %s110
      %p117 = scmp.eq.s32.totalorder %s23, 3
      %p118 = por %p116, %p117
      %p119 = scmp.ne.s32.totalorder %s110, %s111
      %p120 = scmp.eq.s32.totalorder %s23, 0
      %p121 = por %p119, %p120
      %p122 = scmp.ne.s32.totalorder %s110, %s111
      %p123 = scmp.eq.s32.totalorder %s24, 3
      %p124 = por %p122, %p123
      %p126 = scmp.ne.s32.totalorder %s111, %s125
      %p127 = scmp.eq.s32.totalorder %s24, 0
      %p128 = por %p126, %p127
      %s130 = sadd.s32 %s129, 1
      %p133 = scmp.eq.s32.totalorder %s18, 3
      %p134 = scmp.ne.s32.totalorder %s129, %s131
      %p135 = scmp.eq.s32.totalorder %s18, 0
      %p136 = por %p134, %p135
      %p137 = scmp.ne.s32.totalorder %s129, %s131
      %p138 = scmp.eq.s32.totalorder %s23, 3
      %p139 = por %p137, %p138
      %p140 = scmp.ne.s32.totalorder %s131, %s132
      %p141 = scmp.eq.s32.totalorder %s23, 0
      %p142 = por %p140, %p141
      %p143 = scmp.ne.s32.totalorder %s131, %s132
      %p144 = scmp.eq.s32.totalorder %s24, 3
      %p145 = por %p143, %p144
      %p147 = scmp.ne.s32.totalorder %s132, %s146
      %p148 = scmp.eq.s32.totalorder %s24, 0
      %p149 = por %p147, %p148
      %s150 = ssub.s32 %s25, %s37
      %s151 = ssub.s32 %s26, %s33
      %s152 = sor.u32 %s150, %s151
      %p153 = scmp.eq.s32.totalorder %s152, 0
      %s155 = sadd.s32 %s154, 1
      %s156 = scalar_select %p153, %s154, %s155
      %p159 = pneg %p153
      %p160 = scmp.eq.s32.totalorder %s18, 3
      %p161 = por %p159, %p160
      %p162 = scmp.ne.s32.totalorder %s154, %s157
      %p163 = scmp.eq.s32.totalorder %s18, 0
      %p164 = por %p162, %p163
      %p165 = scmp.ne.s32.totalorder %s154, %s157
      %p166 = scmp.eq.s32.totalorder %s23, 3
      %p167 = por %p165, %p166
      %p168 = scmp.ne.s32.totalorder %s157, %s158
      %p169 = scmp.eq.s32.totalorder %s23, 0
      %p170 = por %p168, %p169
      %p171 = scmp.ne.s32.totalorder %s157, %s158
      %p172 = scmp.eq.s32.totalorder %s24, 3
      %p173 = por %p171, %p172
      %p175 = scmp.ne.s32.totalorder %s158, %s174
      %p176 = scmp.eq.s32.totalorder %s24, 0
      %p177 = por %p175, %p176
      %p178 = scmp.le.s32.totalorder 1, %s18
      %p179 = scmp.lt.s32.totalorder %s18, 5
      %p180 = pnand %p178, %p179
      %p181 = pneg %p180
      // Predicated region
      $region9: #{tpu_custom_call.1} parent=5 // pred_check
        _
      $region10: #{tpu_custom_call.1} parent=5 // pred_check_branch
        %183 = sbr.rel (%p180) target = $region12
      $region11: #{tpu_custom_call.1} parent=5 // pred_region
        %s184 = ssub.s32 %s18, 1
        // Predicated region
        $region13: #{tpu_custom_call.1} parent=11 // pred_check
          %p185 = pneg %p79
        $region14: #{tpu_custom_call.1} parent=11 // pred_check_branch
          %187 = sbr.rel (%p185) target = $region16
        $region15: #{tpu_custom_call.1} parent=11 // pred_region
          %s189 = ssub.s32 2048, 2048
          %190 = vsyncadd [#allocation6], %s189
          %s191 = sshll.u32 [#allocation5], 4
          %s192 = int_to_ptr.vmem [resolvable:$true] %s191
          %197 = dma.hbm_to_vmem [thread:$0]  %s1, 2048, %s192, [#allocation6], 128, 128, 8
        $region16: #{tpu_custom_call.1} parent=11 // pred_fallthru
          _
        // Predicated region
        $region17: #{tpu_custom_call.1} parent=11 // pred_check
          %p198 = pneg %p100
        $region18: #{tpu_custom_call.1} parent=11 // pred_check_branch
          %200 = sbr.rel (%p198) target = $region20
        $region19: #{tpu_custom_call.1} parent=11 // pred_region
          _
        $region20: #{tpu_custom_call.1} parent=11 // pred_fallthru
          _
        // Predicated region
        $region21: #{tpu_custom_call.1} parent=11 // pred_check
          %p201 = pneg %p121
        $region22: #{tpu_custom_call.1} parent=11 // pred_check_branch
          %203 = sbr.rel (%p201) target = $region24
        $region23: #{tpu_custom_call.1} parent=11 // pred_region
          %s205 = ssub.s32 2048, 2048
          %206 = vsyncadd [#allocation6], %s205
          %s207 = sshll.u32 [#allocation7], 4
          %s208 = int_to_ptr.vmem [resolvable:$true] %s207
          %213 = dma.hbm_to_vmem [thread:$0]  %s3, 2048, %s208, [#allocation6], 64, 64, 4
        $region24: #{tpu_custom_call.1} parent=11 // pred_fallthru
          _
        // Predicated region
        $region25: #{tpu_custom_call.1} parent=11 // pred_check
          %p214 = pneg %p142
        $region26: #{tpu_custom_call.1} parent=11 // pred_check_branch
          %216 = sbr.rel (%p214) target = $region28
        $region27: #{tpu_custom_call.1} parent=11 // pred_region
          _
        $region28: #{tpu_custom_call.1} parent=11 // pred_fallthru
          _
      $region12: #{tpu_custom_call.1} parent=5 // pred_fallthru
        _
      %p217 = scmp.lt.s32.totalorder %s18, 4
      // Predicated region
      $region29: #{tpu_custom_call.1} parent=5 // pred_check
        %p218 = pneg %p217
      $region30: #{tpu_custom_call.1} parent=5 // pred_check_branch
        %220 = sbr.rel (%p218) target = $region32
      $region31: #{tpu_custom_call.1} parent=5 // pred_region
        // Predicated region
        $region33: #{tpu_custom_call.1} parent=31 // pred_check
          %p221 = pneg %p52
        $region34: #{tpu_custom_call.1} parent=31 // pred_check_branch
          %223 = sbr.rel (%p221) target = $region36
        $region35: #{tpu_custom_call.1} parent=31 // pred_region
          %s224 = sand.u32 %s42, 1
          %s225 = scalar_lea.sflag [#allocation3], %s224
          %s226 = sand.u32 %s42, 1
          %s227 = smul.addr %s226, 64
          %s228 = scalar_lea.vmem [#allocation2], %s227
          %s229 = smul.u32 16, %s26
          %s231 = ssub.s32 1024, 1024
          %232 = vsyncadd %s225, %s231
          %s233 = smul.addr %s25, 32
          %s234 = sadd.s32 %s229, %s233
          %s235 = smul.addr %s234, 64
          %s236 = scalar_lea.hbm %s0, %s235
          %s237 = sshll.u32 %s228, 4
          %s238 = int_to_ptr.vmem [resolvable:$true] %s237
          %243 = dma.hbm_to_vmem [thread:$0]  %s236, 1024, %s238, %s225, 64, 64, 4
        $region36: #{tpu_custom_call.1} parent=31 // pred_fallthru
          _
      $region32: #{tpu_custom_call.1} parent=5 // pred_fallthru
        _
      %p244 = scmp.le.s32.totalorder 1, %s18
      %p245 = scmp.lt.s32.totalorder %s18, 5
      %p246 = pnand %p244, %p245
      %p247 = pneg %p246
      // Predicated region
      $region37: #{tpu_custom_call.1} parent=5 // pred_check
        _
      $region38: #{tpu_custom_call.1} parent=5 // pred_check_branch
        %249 = sbr.rel (%p246) target = $region40
      $region39: #{tpu_custom_call.1} parent=5 // pred_region
        %s250 = ssub.s32 %s18, 1
        %s251 = sand.u32 %s45, 1
        %s252 = scalar_lea.sflag [#allocation3], %s251
        %s253 = sand.u32 %s45, 1
        %s254 = smul.addr %s253, 64
        %s255 = scalar_lea.vmem [#allocation2], %s254
        // Predicated region
        $region41: #{tpu_custom_call.1} parent=39 // pred_check
          %p256 = pneg %p58
        $region42: #{tpu_custom_call.1} parent=39 // pred_check_branch
          %258 = sbr.rel (%p256) target = $region44
        $region43: #{tpu_custom_call.1} parent=39 // pred_region
          %259 = dma.done %s252, 1024
        $region44: #{tpu_custom_call.1} parent=39 // pred_fallthru
          _
        // Predicated region
        $region45: #{tpu_custom_call.1} parent=39 // pred_check
          %p260 = pneg %p79
        $region46: #{tpu_custom_call.1} parent=39 // pred_check_branch
          %262 = sbr.rel (%p260) target = $region48
        $region47: #{tpu_custom_call.1} parent=39 // pred_region
          %263 = dma.done [#allocation6], 2048
        $region48: #{tpu_custom_call.1} parent=39 // pred_fallthru
          _
        // Predicated region
        $region49: #{tpu_custom_call.1} parent=39 // pred_check
          %p264 = pneg %p121
        $region50: #{tpu_custom_call.1} parent=39 // pred_check_branch
          %266 = sbr.rel (%p264) target = $region52
        $region51: #{tpu_custom_call.1} parent=39 // pred_region
          %267 = dma.done [#allocation6], 2048
        $region52: #{tpu_custom_call.1} parent=39 // pred_fallthru
          _
        %s268 = sand.u32 %s45, 1
        %s269 = scalar_lea.sflag [#allocation3], %s268
        %s270 = sand.u32 %s45, 1
        %s271 = smul.addr %s270, 64
        %s272 = scalar_lea.vmem [#allocation2], %s271
        %p273 = pneg %p58
        %p274 = pneg %p55
        %p275 = pneg %p79
        %p276 = pneg %p76
        %p277 = pneg %p100
        %p278 = pneg %p97
        %p279 = pneg %p121
        %p280 = pneg %p118
        %p281 = pneg %p142
        %p282 = pneg %p139
        %p283 = pneg %p170
        %p284 = pneg %p167
        %s285 = sand.u32 %s157, 1
        %s286 = scalar_lea.sflag [#allocation4], %s285
        %s287 = sand.u32 %s157, 1
        %s288 = smul.addr %s287, 64
        %s289 = scalar_lea.vmem [#allocation8], %s288
        %s290 = smul.u32 16, %s28
        %s291 = smul.u32 16, %s28
        %v293 = vld [vmem:[%s255] sm:$0xf]
        %v294 = vld [vmem:[%s255 + $0x4] sm:$0xf]
        %v295 = vld [vmem:[%s255 + $0x8] sm:$0xf]
        %v296 = vld [vmem:[%s255 + $0xc] sm:$0xf]
        %v297 = vld [vmem:[%s255 + $0x10] sm:$0xf]
        %v298 = vld [vmem:[%s255 + $0x14] sm:$0xf]
        %v299 = vld [vmem:[%s255 + $0x18] sm:$0xf]
        %v300 = vld [vmem:[%s255 + $0x1c] sm:$0xf]
        %v301 = vld [vmem:[%s255 + $0x20] sm:$0xf]
        %v302 = vld [vmem:[%s255 + $0x24] sm:$0xf]
        %v303 = vld [vmem:[%s255 + $0x28] sm:$0xf]
        %v304 = vld [vmem:[%s255 + $0x2c] sm:$0xf]
        %v305 = vld [vmem:[%s255 + $0x30] sm:$0xf]
        %v306 = vld [vmem:[%s255 + $0x34] sm:$0xf]
        %v307 = vld [vmem:[%s255 + $0x38] sm:$0xf]
        %v308 = vld [vmem:[%s255 + $0x3c] sm:$0xf]
        %v309 = vld [vmem:[#allocation5] sm:$0xff]
        %v310 = vld [vmem:[#allocation5 + $0x8] sm:$0xff]
        %v311 = vld [vmem:[#allocation5 + $0x10] sm:$0xff]
        %v312 = vld [vmem:[#allocation5 + $0x18] sm:$0xff]
        %v313 = vld [vmem:[#allocation5 + $0x20] sm:$0xff]
        %v314 = vld [vmem:[#allocation5 + $0x28] sm:$0xff]
        %v315 = vld [vmem:[#allocation5 + $0x30] sm:$0xff]
        %v316 = vld [vmem:[#allocation5 + $0x38] sm:$0xff]
        %v317 = vld [vmem:[#allocation5 + $0x40] sm:$0xff]
        %v318 = vld [vmem:[#allocation5 + $0x48] sm:$0xff]
        %v319 = vld [vmem:[#allocation5 + $0x50] sm:$0xff]
        %v320 = vld [vmem:[#allocation5 + $0x58] sm:$0xff]
        %v321 = vld [vmem:[#allocation5 + $0x60] sm:$0xff]
        %v322 = vld [vmem:[#allocation5 + $0x68] sm:$0xff]
        %v323 = vld [vmem:[#allocation5 + $0x70] sm:$0xff]
        %v324 = vld [vmem:[#allocation5 + $0x78] sm:$0xff]
        %v325 = vld [vmem:[%s2] sm:$0x3]
        %v327 = vlaneseq
        %v328 = vshrl.u32 %v327, 7
        %v329 = vsub.s32 0, %v328
        %v330 = vrot.slane %v325, %v329
        %v331 = vlaneseq
        %v332 = vshrl.u32 %v331, 7
        %v333 = vsub.s32 1, %v332
        %v334 = vrot.slane %v325, %v333
        %v353 = vunpack.c.l.b16 %v293
        %v354 = vunpack.c.l.b16 %v294
        %v355 = vunpack.c.l.b16 %v295
        %v356 = vunpack.c.l.b16 %v296
        %v357 = vunpack.c.l.b16 %v297
        %v358 = vunpack.c.l.b16 %v298
        %v359 = vunpack.c.l.b16 %v299
        %v360 = vunpack.c.l.b16 %v300
        %v361 = vunpack.c.l.b16 %v301
        %v362 = vunpack.c.l.b16 %v302
        %v363 = vunpack.c.l.b16 %v303
        %v364 = vunpack.c.l.b16 %v304
        %v365 = vunpack.c.l.b16 %v305
        %v366 = vunpack.c.l.b16 %v306
        %v367 = vunpack.c.l.b16 %v307
        %v368 = vunpack.c.l.b16 %v308
        %v369 = vpack.c.b16 %v354, %v353
        %v370 = vpack.c.b16 %v356, %v355
        %v371 = vpack.c.b16 %v358, %v357
        %v372 = vpack.c.b16 %v360, %v359
        %v373 = vpack.c.b16 %v362, %v361
        %v374 = vpack.c.b16 %v364, %v363
        %v375 = vpack.c.b16 %v366, %v365
        %v376 = vpack.c.b16 %v368, %v367
        %v401 = vunpack.c.l.b16 %v309
        %v402 = vunpack.c.h.b16 %v309
        %v403 = vunpack.c.l.b16 %v310
        %v404 = vunpack.c.h.b16 %v310
        %v405 = vunpack.c.l.b16 %v311
        %v406 = vunpack.c.h.b16 %v311
        %v407 = vunpack.c.l.b16 %v312
        %v408 = vunpack.c.h.b16 %v312
        %v409 = vunpack.c.l.b16 %v313
        %v410 = vunpack.c.h.b16 %v313
        %v411 = vunpack.c.l.b16 %v314
        %v412 = vunpack.c.h.b16 %v314
        %v413 = vunpack.c.l.b16 %v315
        %v414 = vunpack.c.h.b16 %v315
        %v415 = vunpack.c.l.b16 %v316
        %v416 = vunpack.c.h.b16 %v316
        %v417 = vunpack.c.l.b16 %v317
        %v418 = vunpack.c.h.b16 %v317
        %v419 = vunpack.c.l.b16 %v318
        %v420 = vunpack.c.h.b16 %v318
        %v421 = vunpack.c.l.b16 %v319
        %v422 = vunpack.c.h.b16 %v319
        %v423 = vunpack.c.l.b16 %v320
        %v424 = vunpack.c.h.b16 %v320
        %v425 = vunpack.c.l.b16 %v321
        %v426 = vunpack.c.h.b16 %v321
        %v427 = vunpack.c.l.b16 %v322
        %v428 = vunpack.c.h.b16 %v322
        %v429 = vunpack.c.l.b16 %v323
        %v430 = vunpack.c.h.b16 %v323
        %v431 = vunpack.c.l.b16 %v324
        %v432 = vunpack.c.h.b16 %v324
        %v433 = vpack.c.b16 %v403, %v401
        %v434 = vpack.c.b16 %v404, %v402
        %v435 = vpack.c.b16 %v407, %v405
        %v436 = vpack.c.b16 %v408, %v406
        %v437 = vpack.c.b16 %v411, %v409
        %v438 = vpack.c.b16 %v412, %v410
        %v439 = vpack.c.b16 %v415, %v413
        %v440 = vpack.c.b16 %v416, %v414
        %v441 = vpack.c.b16 %v419, %v417
        %v442 = vpack.c.b16 %v420, %v418
        %v443 = vpack.c.b16 %v423, %v421
        %v444 = vpack.c.b16 %v424, %v422
        %v445 = vpack.c.b16 %v427, %v425
        %v446 = vpack.c.b16 %v428, %v426
        %v447 = vpack.c.b16 %v431, %v429
        %v448 = vpack.c.b16 %v432, %v430
        %465 = vmatprep.subr.bf16.mxu0 %v448
        %466 = vmatpush1.bf16.msra.mxu0 %v447
        %467 = vmatprep.subr.bf16.mxu0 %v446
        %468 = vmatpush1.bf16.msra.mxu0 %v445
        %469 = vmatprep.subr.bf16.mxu0 %v444
        %470 = vmatpush1.bf16.msra.mxu0 %v443
        %471 = vmatprep.subr.bf16.mxu0 %v442
        %472 = vmatpush1.bf16.msra.mxu0 %v441
        %473 = vmatprep.subr.bf16.mxu0 %v440
        %474 = vmatpush1.bf16.msra.mxu0 %v439
        %475 = vmatprep.subr.bf16.mxu0 %v438
        %476 = vmatpush1.bf16.msra.mxu0 %v437
        %477 = vmatprep.subr.bf16.mxu0 %v436
        %478 = vmatpush1.bf16.msra.mxu0 %v435
        %479 = vmatprep.subr.bf16.mxu0 %v434
        %480 = vmatpush1.bf16.msra.mxu0 %v433
        %481 = vmatprep.subr.bf16.mxu0 0
        %482 = vmatpush2.bf16.msra.mxu0 0
        %483 = vmatprep.subr.bf16.mxu0 0
        %484 = vmatpush2.bf16.msra.mxu0 0
        %485 = vmatprep.subr.bf16.mxu0 0
        %486 = vmatpush2.bf16.msra.mxu0 0
        %487 = vmatprep.subr.bf16.mxu0 0
        %488 = vmatpush2.bf16.msra.mxu0 0
        %489 = vmatprep.subr.bf16.mxu0 0
        %490 = vmatpush2.bf16.msra.mxu0 0
        %491 = vmatprep.subr.bf16.mxu0 0
        %492 = vmatpush2.bf16.msra.mxu0 0
        %493 = vmatprep.subr.bf16.mxu0 0
        %494 = vmatpush2.bf16.msra.mxu0 0
        %495 = vmatprep.subr.bf16.mxu0 0
        %496 = vmatpush2.bf16.msra.mxu0 0
        %497 = vmatprep.mubr.bf16.mxu0 0
        %498 = vmatmul.mubr.bf16.gmra.mxu0 %v369
        %v499 = vpop.f32.mrf.mxu0
        %v500 = vadd.f32 %v330, %v499
        %v501 = vpop.f32.mrf.mxu0
        %v502 = vadd.f32 %v334, %v501
        %v503 = vpop.f32.mrf.mxu0
        %v504 = vadd.f32 %v330, %v503
        %v505 = vpop.f32.mrf.mxu0
        %v506 = vadd.f32 %v334, %v505
        %507 = vmatprep.mubr.bf16.mxu0 0
        %508 = vmatmul.mubr.bf16.gmra.mxu0 %v370
        %v509 = vpop.f32.mrf.mxu0
        %v510 = vadd.f32 %v330, %v509
        %v511 = vpop.f32.mrf.mxu0
        %v512 = vadd.f32 %v334, %v511
        %v513 = vpop.f32.mrf.mxu0
        %v514 = vadd.f32 %v330, %v513
        %v515 = vpop.f32.mrf.mxu0
        %v516 = vadd.f32 %v334, %v515
        %517 = vmatprep.mubr.bf16.mxu0 0
        %518 = vmatmul.mubr.bf16.gmra.mxu0 %v371
        %v519 = vpop.f32.mrf.mxu0
        %v520 = vadd.f32 %v330, %v519
        %v521 = vpop.f32.mrf.mxu0
        %v522 = vadd.f32 %v334, %v521
        %v523 = vpop.f32.mrf.mxu0
        %v524 = vadd.f32 %v330, %v523
        %v525 = vpop.f32.mrf.mxu0
        %v526 = vadd.f32 %v334, %v525
        %527 = vmatprep.mubr.bf16.mxu0 0
        %528 = vmatmul.mubr.bf16.gmra.mxu0 %v372
        %v529 = vpop.f32.mrf.mxu0
        %v530 = vadd.f32 %v330, %v529
        %v531 = vpop.f32.mrf.mxu0
        %v532 = vadd.f32 %v334, %v531
        %v533 = vpop.f32.mrf.mxu0
        %v534 = vadd.f32 %v330, %v533
        %v535 = vpop.f32.mrf.mxu0
        %v536 = vadd.f32 %v334, %v535
        %537 = vmatprep.mubr.bf16.mxu0 0
        %538 = vmatmul.mubr.bf16.gmra.mxu0 %v373
        %v539 = vpop.f32.mrf.mxu0
        %v540 = vadd.f32 %v330, %v539
        %v541 = vpop.f32.mrf.mxu0
        %v542 = vadd.f32 %v334, %v541
        %v543 = vpop.f32.mrf.mxu0
        %v544 = vadd.f32 %v330, %v543
        %v545 = vpop.f32.mrf.mxu0
        %v546 = vadd.f32 %v334, %v545
        %547 = vmatprep.mubr.bf16.mxu0 0
        %548 = vmatmul.mubr.bf16.gmra.mxu0 %v374
        %v549 = vpop.f32.mrf.mxu0
        %v550 = vadd.f32 %v330, %v549
        %v551 = vpop.f32.mrf.mxu0
        %v552 = vadd.f32 %v334, %v551
        %v553 = vpop.f32.mrf.mxu0
        %v554 = vadd.f32 %v330, %v553
        %v555 = vpop.f32.mrf.mxu0
        %v556 = vadd.f32 %v334, %v555
        %557 = vmatprep.mubr.bf16.mxu0 0
        %558 = vmatmul.mubr.bf16.gmra.mxu0 %v375
        %v559 = vpop.f32.mrf.mxu0
        %v560 = vadd.f32 %v330, %v559
        %v561 = vpop.f32.mrf.mxu0
        %v562 = vadd.f32 %v334, %v561
        %v563 = vpop.f32.mrf.mxu0
        %v564 = vadd.f32 %v330, %v563
        %v565 = vpop.f32.mrf.mxu0
        %v566 = vadd.f32 %v334, %v565
        %567 = vmatprep.mubr.bf16.mxu0 0
        %568 = vmatmul.mubr.bf16.gmra.mxu0 %v376
        %v569 = vpop.f32.mrf.mxu0
        %v570 = vadd.f32 %v330, %v569
        %v571 = vpop.f32.mrf.mxu0
        %v572 = vadd.f32 %v334, %v571
        %v573 = vpop.f32.mrf.mxu0
        %v574 = vadd.f32 %v330, %v573
        %v575 = vpop.f32.mrf.mxu0
        %v576 = vadd.f32 %v334, %v575
        %577 = vdwg.mxu0
        %v578 = vmax.f32 %v500, 0.0
        %v579 = vmax.f32 %v502, 0.0
        %v580 = vmax.f32 %v504, 0.0
        %v581 = vmax.f32 %v506, 0.0
        %v582 = vmax.f32 %v510, 0.0
        %v583 = vmax.f32 %v512, 0.0
        %v584 = vmax.f32 %v514, 0.0
        %v585 = vmax.f32 %v516, 0.0
        %v586 = vmax.f32 %v520, 0.0
        %v587 = vmax.f32 %v522, 0.0
        %v588 = vmax.f32 %v524, 0.0
        %v589 = vmax.f32 %v526, 0.0
        %v590 = vmax.f32 %v530, 0.0
        %v591 = vmax.f32 %v532, 0.0
        %v592 = vmax.f32 %v534, 0.0
        %v593 = vmax.f32 %v536, 0.0
        %v594 = vmax.f32 %v540, 0.0
        %v595 = vmax.f32 %v542, 0.0
        %v596 = vmax.f32 %v544, 0.0
        %v597 = vmax.f32 %v546, 0.0
        %v598 = vmax.f32 %v550, 0.0
        %v599 = vmax.f32 %v552, 0.0
        %v600 = vmax.f32 %v554, 0.0
        %v601 = vmax.f32 %v556, 0.0
        %v602 = vmax.f32 %v560, 0.0
        %v603 = vmax.f32 %v562, 0.0
        %v604 = vmax.f32 %v564, 0.0
        %v605 = vmax.f32 %v566, 0.0
        %v606 = vmax.f32 %v570, 0.0
        %v607 = vmax.f32 %v572, 0.0
        %v608 = vmax.f32 %v574, 0.0
        %v609 = vmax.f32 %v576, 0.0
        %v610 = vpack.c.bf16 %v580, %v578
        %v611 = vpack.c.bf16 %v581, %v579
        %v612 = vpack.c.bf16 %v584, %v582
        %v613 = vpack.c.bf16 %v585, %v583
        %v614 = vpack.c.bf16 %v588, %v586
        %v615 = vpack.c.bf16 %v589, %v587
        %v616 = vpack.c.bf16 %v592, %v590
        %v617 = vpack.c.bf16 %v593, %v591
        %v618 = vpack.c.bf16 %v596, %v594
        %v619 = vpack.c.bf16 %v597, %v595
        %v620 = vpack.c.bf16 %v600, %v598
        %v621 = vpack.c.bf16 %v601, %v599
        %v622 = vpack.c.bf16 %v604, %v602
        %v623 = vpack.c.bf16 %v605, %v603
        %v624 = vpack.c.bf16 %v608, %v606
        %v625 = vpack.c.bf16 %v609, %v607
        %v626 = vld [vmem:[#allocation7] sm:$0xf]
        %v627 = vld [vmem:[#allocation7 + $0x4] sm:$0xf]
        %v628 = vld [vmem:[#allocation7 + $0x8] sm:$0xf]
        %v629 = vld [vmem:[#allocation7 + $0xc] sm:$0xf]
        %v630 = vld [vmem:[#allocation7 + $0x10] sm:$0xf]
        %v631 = vld [vmem:[#allocation7 + $0x14] sm:$0xf]
        %v632 = vld [vmem:[#allocation7 + $0x18] sm:$0xf]
        %v633 = vld [vmem:[#allocation7 + $0x1c] sm:$0xf]
        %v634 = vld [vmem:[#allocation7 + $0x20] sm:$0xf]
        %v635 = vld [vmem:[#allocation7 + $0x24] sm:$0xf]
        %v636 = vld [vmem:[#allocation7 + $0x28] sm:$0xf]
        %v637 = vld [vmem:[#allocation7 + $0x2c] sm:$0xf]
        %v638 = vld [vmem:[#allocation7 + $0x30] sm:$0xf]
        %v639 = vld [vmem:[#allocation7 + $0x34] sm:$0xf]
        %v640 = vld [vmem:[#allocation7 + $0x38] sm:$0xf]
        %v641 = vld [vmem:[#allocation7 + $0x3c] sm:$0xf]
        %v642 = vld [vmem:[#allocation7 + $0x40] sm:$0xf]
        %v643 = vld [vmem:[#allocation7 + $0x44] sm:$0xf]
        %v644 = vld [vmem:[#allocation7 + $0x48] sm:$0xf]
        %v645 = vld [vmem:[#allocation7 + $0x4c] sm:$0xf]
        %v646 = vld [vmem:[#allocation7 + $0x50] sm:$0xf]
        %v647 = vld [vmem:[#allocation7 + $0x54] sm:$0xf]
        %v648 = vld [vmem:[#allocation7 + $0x58] sm:$0xf]
        %v649 = vld [vmem:[#allocation7 + $0x5c] sm:$0xf]
        %v650 = vld [vmem:[#allocation7 + $0x60] sm:$0xf]
        %v651 = vld [vmem:[#allocation7 + $0x64] sm:$0xf]
        %v652 = vld [vmem:[#allocation7 + $0x68] sm:$0xf]
        %v653 = vld [vmem:[#allocation7 + $0x6c] sm:$0xf]
        %v654 = vld [vmem:[#allocation7 + $0x70] sm:$0xf]
        %v655 = vld [vmem:[#allocation7 + $0x74] sm:$0xf]
        %v656 = vld [vmem:[#allocation7 + $0x78] sm:$0xf]
        %v657 = vld [vmem:[#allocation7 + $0x7c] sm:$0xf]
        %v658 = vld [vmem:[%s4] sm:$0x1]
        %v660 = vlaneseq
        %v661 = vshrl.u32 %v660, 7
        %v662 = vsub.s32 0, %v661
        %v663 = vrot.slane %v658, %v662
        %v697 = vunpack.c.l.b16 %v626
        %v698 = vunpack.c.l.b16 %v627
        %v699 = vunpack.c.l.b16 %v628
        %v700 = vunpack.c.l.b16 %v629
        %v701 = vunpack.c.l.b16 %v630
        %v702 = vunpack.c.l.b16 %v631
        %v703 = vunpack.c.l.b16 %v632
        %v704 = vunpack.c.l.b16 %v633
        %v705 = vunpack.c.l.b16 %v634
        %v706 = vunpack.c.l.b16 %v635
        %v707 = vunpack.c.l.b16 %v636
        %v708 = vunpack.c.l.b16 %v637
        %v709 = vunpack.c.l.b16 %v638
        %v710 = vunpack.c.l.b16 %v639
        %v711 = vunpack.c.l.b16 %v640
        %v712 = vunpack.c.l.b16 %v641
        %v713 = vunpack.c.l.b16 %v642
        %v714 = vunpack.c.l.b16 %v643
        %v715 = vunpack.c.l.b16 %v644
        %v716 = vunpack.c.l.b16 %v645
        %v717 = vunpack.c.l.b16 %v646
        %v718 = vunpack.c.l.b16 %v647
        %v719 = vunpack.c.l.b16 %v648
        %v720 = vunpack.c.l.b16 %v649
        %v721 = vunpack.c.l.b16 %v650
        %v722 = vunpack.c.l.b16 %v651
        %v723 = vunpack.c.l.b16 %v652
        %v724 = vunpack.c.l.b16 %v653
        %v725 = vunpack.c.l.b16 %v654
        %v726 = vunpack.c.l.b16 %v655
        %v727 = vunpack.c.l.b16 %v656
        %v728 = vunpack.c.l.b16 %v657
        %v729 = vpack.c.b16 %v698, %v697
        %v730 = vpack.c.b16 %v700, %v699
        %v731 = vpack.c.b16 %v702, %v701
        %v732 = vpack.c.b16 %v704, %v703
        %v733 = vpack.c.b16 %v706, %v705
        %v734 = vpack.c.b16 %v708, %v707
        %v735 = vpack.c.b16 %v710, %v709
        %v736 = vpack.c.b16 %v712, %v711
        %v737 = vpack.c.b16 %v714, %v713
        %v738 = vpack.c.b16 %v716, %v715
        %v739 = vpack.c.b16 %v718, %v717
        %v740 = vpack.c.b16 %v720, %v719
        %v741 = vpack.c.b16 %v722, %v721
        %v742 = vpack.c.b16 %v724, %v723
        %v743 = vpack.c.b16 %v726, %v725
        %v744 = vpack.c.b16 %v728, %v727
        %761 = vmatprep.subr.bf16.mxu0 0
        %762 = vmatpush1.bf16.msra.mxu0 %v736
        %763 = vmatprep.subr.bf16.mxu0 0
        %764 = vmatpush1.bf16.msra.mxu0 %v735
        %765 = vmatprep.subr.bf16.mxu0 0
        %766 = vmatpush1.bf16.msra.mxu0 %v734
        %767 = vmatprep.subr.bf16.mxu0 0
        %768 = vmatpush1.bf16.msra.mxu0 %v733
        %769 = vmatprep.subr.bf16.mxu0 0
        %770 = vmatpush1.bf16.msra.mxu0 %v732
        %771 = vmatprep.subr.bf16.mxu0 0
        %772 = vmatpush1.bf16.msra.mxu0 %v731
        %773 = vmatprep.subr.bf16.mxu0 0
        %774 = vmatpush1.bf16.msra.mxu0 %v730
        %775 = vmatprep.subr.bf16.mxu0 0
        %776 = vmatpush1.bf16.msra.mxu0 %v729
        %777 = vmatprep.subr.bf16.mxu0 0
        %778 = vmatpush2.bf16.msra.mxu0 %v744
        %779 = vmatprep.subr.bf16.mxu0 0
        %780 = vmatpush2.bf16.msra.mxu0 %v743
        %781 = vmatprep.subr.bf16.mxu0 0
        %782 = vmatpush2.bf16.msra.mxu0 %v742
        %783 = vmatprep.subr.bf16.mxu0 0
        %784 = vmatpush2.bf16.msra.mxu0 %v741
        %785 = vmatprep.subr.bf16.mxu0 0
        %786 = vmatpush2.bf16.msra.mxu0 %v740
        %787 = vmatprep.subr.bf16.mxu0 0
        %788 = vmatpush2.bf16.msra.mxu0 %v739
        %789 = vmatprep.subr.bf16.mxu0 0
        %790 = vmatpush2.bf16.msra.mxu0 %v738
        %791 = vmatprep.subr.bf16.mxu0 0
        %792 = vmatpush2.bf16.msra.mxu0 %v737
        %793 = vmatprep.mubr.bf16.mxu0 %v611
        %794 = vmatmul.mubr.bf16.gmra.mxu0 %v610
        %v795 = vpop.f32.mrf.mxu0
        %v796 = vadd.f32 %v663, %v795
        %v797 = vpop.f32.mrf.mxu0
        %v798 = vpop.f32.mrf.mxu0
        %v799 = vadd.f32 %v663, %v798
        %v800 = vpop.f32.mrf.mxu0
        %801 = vmatprep.mubr.bf16.mxu0 %v613
        %802 = vmatmul.mubr.bf16.gmra.mxu0 %v612
        %v803 = vpop.f32.mrf.mxu0
        %v804 = vadd.f32 %v663, %v803
        %v805 = vpop.f32.mrf.mxu0
        %v806 = vpop.f32.mrf.mxu0
        %v807 = vadd.f32 %v663, %v806
        %v808 = vpop.f32.mrf.mxu0
        %809 = vmatprep.mubr.bf16.mxu0 %v615
        %810 = vmatmul.mubr.bf16.gmra.mxu0 %v614
        %v811 = vpop.f32.mrf.mxu0
        %v812 = vadd.f32 %v663, %v811
        %v813 = vpop.f32.mrf.mxu0
        %v814 = vpop.f32.mrf.mxu0
        %v815 = vadd.f32 %v663, %v814
        %v816 = vpop.f32.mrf.mxu0
        %817 = vmatprep.mubr.bf16.mxu0 %v617
        %818 = vmatmul.mubr.bf16.gmra.mxu0 %v616
        %v819 = vpop.f32.mrf.mxu0
        %v820 = vadd.f32 %v663, %v819
        %v821 = vpop.f32.mrf.mxu0
        %v822 = vpop.f32.mrf.mxu0
        %v823 = vadd.f32 %v663, %v822
        %v824 = vpop.f32.mrf.mxu0
        %825 = vmatprep.mubr.bf16.mxu0 %v619
        %826 = vmatmul.mubr.bf16.gmra.mxu0 %v618
        %v827 = vpop.f32.mrf.mxu0
        %v828 = vadd.f32 %v663, %v827
        %v829 = vpop.f32.mrf.mxu0
        %v830 = vpop.f32.mrf.mxu0
        %v831 = vadd.f32 %v663, %v830
        %v832 = vpop.f32.mrf.mxu0
        %833 = vmatprep.mubr.bf16.mxu0 %v621
        %834 = vmatmul.mubr.bf16.gmra.mxu0 %v620
        %v835 = vpop.f32.mrf.mxu0
        %v836 = vadd.f32 %v663, %v835
        %v837 = vpop.f32.mrf.mxu0
        %v838 = vpop.f32.mrf.mxu0
        %v839 = vadd.f32 %v663, %v838
        %v840 = vpop.f32.mrf.mxu0
        %841 = vmatprep.mubr.bf16.mxu0 %v623
        %842 = vmatmul.mubr.bf16.gmra.mxu0 %v622
        %v843 = vpop.f32.mrf.mxu0
        %v844 = vadd.f32 %v663, %v843
        %v845 = vpop.f32.mrf.mxu0
        %v846 = vpop.f32.mrf.mxu0
        %v847 = vadd.f32 %v663, %v846
        %v848 = vpop.f32.mrf.mxu0
        %849 = vmatprep.mubr.bf16.mxu0 %v625
        %850 = vmatmul.mubr.bf16.gmra.mxu0 %v624
        %v851 = vpop.f32.mrf.mxu0
        %v852 = vadd.f32 %v663, %v851
        %v853 = vpop.f32.mrf.mxu0
        %v854 = vpop.f32.mrf.mxu0
        %v855 = vadd.f32 %v663, %v854
        %v856 = vpop.f32.mrf.mxu0
        %857 = vdwg.mxu0
        %v858 = vpack.c.bf16 %v799, %v796
        %v859 = vpack.c.bf16 %v807, %v804
        %v860 = vpack.c.bf16 %v815, %v812
        %v861 = vpack.c.bf16 %v823, %v820
        %v862 = vpack.c.bf16 %v831, %v828
        %v863 = vpack.c.bf16 %v839, %v836
        %v864 = vpack.c.bf16 %v847, %v844
        %v865 = vpack.c.bf16 %v855, %v852
        %v874 = vunpack.c.l.b16 %v858
        %v875 = vunpack.c.h.b16 %v858
        %v876 = vunpack.c.l.b16 %v859
        %v877 = vunpack.c.h.b16 %v859
        %v878 = vunpack.c.l.b16 %v860
        %v879 = vunpack.c.h.b16 %v860
        %v880 = vunpack.c.l.b16 %v861
        %v881 = vunpack.c.h.b16 %v861
        %v882 = vunpack.c.l.b16 %v862
        %v883 = vunpack.c.h.b16 %v862
        %v884 = vunpack.c.l.b16 %v863
        %v885 = vunpack.c.h.b16 %v863
        %v886 = vunpack.c.l.b16 %v864
        %v887 = vunpack.c.h.b16 %v864
        %v888 = vunpack.c.l.b16 %v865
        %v889 = vunpack.c.h.b16 %v865
        %v890 = vpack.c.b16 %v874, %v874
        %v891 = vpack.c.b16 %v875, %v875
        %v892 = vpack.c.b16 %v876, %v876
        %v893 = vpack.c.b16 %v877, %v877
        %v894 = vpack.c.b16 %v878, %v878
        %v895 = vpack.c.b16 %v879, %v879
        %v896 = vpack.c.b16 %v880, %v880
        %v897 = vpack.c.b16 %v881, %v881
        %v898 = vpack.c.b16 %v882, %v882
        %v899 = vpack.c.b16 %v883, %v883
        %v900 = vpack.c.b16 %v884, %v884
        %v901 = vpack.c.b16 %v885, %v885
        %v902 = vpack.c.b16 %v886, %v886
        %v903 = vpack.c.b16 %v887, %v887
        %v904 = vpack.c.b16 %v888, %v888
        %v905 = vpack.c.b16 %v889, %v889
        %922 = vst [vmem:[%s289] sm:$0xf] %v890
        %923 = vst [vmem:[%s289 + $0x4] sm:$0xf] %v891
        %924 = vst [vmem:[%s289 + $0x8] sm:$0xf] %v892
        %925 = vst [vmem:[%s289 + $0xc] sm:$0xf] %v893
        %926 = vst [vmem:[%s289 + $0x10] sm:$0xf] %v894
        %927 = vst [vmem:[%s289 + $0x14] sm:$0xf] %v895
        %928 = vst [vmem:[%s289 + $0x18] sm:$0xf] %v896
        %929 = vst [vmem:[%s289 + $0x1c] sm:$0xf] %v897
        %930 = vst [vmem:[%s289 + $0x20] sm:$0xf] %v898
        %931 = vst [vmem:[%s289 + $0x24] sm:$0xf] %v899
        %932 = vst [vmem:[%s289 + $0x28] sm:$0xf] %v900
        %933 = vst [vmem:[%s289 + $0x2c] sm:$0xf] %v901
        %934 = vst [vmem:[%s289 + $0x30] sm:$0xf] %v902
        %935 = vst [vmem:[%s289 + $0x34] sm:$0xf] %v903
        %936 = vst [vmem:[%s289 + $0x38] sm:$0xf] %v904
        %937 = vst [vmem:[%s289 + $0x3c] sm:$0xf] %v905
        %s938 = sand.u32 %s157, 1
        %s939 = scalar_lea.sflag [#allocation4], %s938
        %s940 = sand.u32 %s157, 1
        %s941 = smul.addr %s940, 64
        %s942 = scalar_lea.vmem [#allocation8], %s941
        // Predicated region
        $region53: #{tpu_custom_call.1} parent=39 // pred_check
          %p943 = pneg %p167
        $region54: #{tpu_custom_call.1} parent=39 // pred_check_branch
          %945 = sbr.rel (%p943) target = $region56
        $region55: #{tpu_custom_call.1} parent=39 // pred_region
          %s946 = smul.u32 16, %s28
          %s948 = ssub.s32 1024, 1024
          %949 = vsyncadd %s939, %s948
          %s950 = smul.addr %s27, 32
          %s951 = sadd.s32 %s946, %s950
          %s952 = smul.addr %s951, 64
          %s953 = scalar_lea.hbm %s5, %s952
          %s954 = sshll.u32 %s942, 4
          %s955 = int_to_ptr.vmem [resolvable:$true] %s954
          %960 = dma.vmem_to_hbm [thread:$0]  %s955, 1024, %s953, %s939, 64, 64, 4
        $region56: #{tpu_custom_call.1} parent=39 // pred_fallthru
          _
      $region40: #{tpu_custom_call.1} parent=5 // pred_fallthru
        _
      %p961 = scmp.le.s32.totalorder 2, %s18
      // Predicated region
      $region57: #{tpu_custom_call.1} parent=5 // pred_check
        %p962 = pneg %p961
      $region58: #{tpu_custom_call.1} parent=5 // pred_check_branch
        %964 = sbr.rel (%p962) target = $region60
      $region59: #{tpu_custom_call.1} parent=5 // pred_region
        %s965 = ssub.s32 %s18, 2
        // Predicated region
        $region61: #{tpu_custom_call.1} parent=59 // pred_check
          %p966 = pneg %p173
        $region62: #{tpu_custom_call.1} parent=59 // pred_check_branch
          %968 = sbr.rel (%p966) target = $region64
        $region63: #{tpu_custom_call.1} parent=59 // pred_region
          %s969 = sand.u32 %s158, 1
          %s970 = scalar_lea.sflag [#allocation4], %s969
          %s971 = sand.u32 %s158, 1
          %s972 = smul.addr %s971, 64
          %s973 = scalar_lea.vmem [#allocation8], %s972
          %974 = dma.done %s970, 1024
        $region64: #{tpu_custom_call.1} parent=59 // pred_fallthru
          _
      $region60: #{tpu_custom_call.1} parent=5 // pred_fallthru
        _
    $region6: #{tpu_custom_call.1} parent=1 // loop_footer
      %s22 = sadd.s32 1, %s18
    $region7: #{tpu_custom_call.1} parent=1 // loop_footer_branch
      %17 = sbr.rel target = $region3
    $region8: #{tpu_custom_call.1} parent=1 // loop_exit
      _
    %975 = vsyncpa [#allocation3], 1
    %s976 = scalar_lea.sflag [#allocation3], 1
    %977 = vsyncpa %s976, 1
    %978 = vsyncpa [#allocation6], 1
    %979 = vsyncpa [#allocation4], 1
    %s980 = scalar_lea.sflag [#allocation4], 1
    %981 = vsyncpa %s980, 1

// kernel: tpu_custom_call.1
$region0: #{tpu_custom_call.1}
  #allocation0 [shape = 'u32[]', space=smem, size = 0x4, offset = 0x4, fixed_abs, tag = 'smem constant byte address 0x4 - core index']
  #allocation1 [shape = 'u32[144,128]{1,0:T(1,128)}', space=vmem, size = 0x12000, scoped, tag = 'internal scratch']
  %s0 = inlined_call_operand.hbm [shape: bf16[2,256,128], index: 0, kind: input, shape index: {}]
  %s1 = inlined_call_operand.hbm [shape: bf16[128,256], index: 1, kind: input, shape index: {}]
  %s2 = inlined_call_operand.vmem [shape: f32[1,256], index: 2, kind: input, shape index: {}]
  %s3 = inlined_call_operand.hbm [shape: bf16[256,128], index: 3, kind: input, shape index: {}]
  %s4 = inlined_call_operand.vmem [shape: f32[1,128], index: 4, kind: input, shape index: {}]
  %s5 = inlined_call_operand.hbm [shape: bf16[2,256,128], index: 5, kind: output, shape index: {}]
  %s6 = sld [smem:[#allocation0]]
  $region65: #{tpu_custom_call.1} parent=0
    _
  %s8 = ssub.s32 1, %s6
  %s9 = scalar_select 0, %s8, %s6
  $region1: #{tpu_custom_call.1} parent=0
    #allocation2 [shape = 'u8[65536]{0}', space=vmem, size = 0x10000, scoped, tag = 'input window, operand 0']
    #allocation3 [shape = 's32[2]{0}', space=sflag, size = 0x8, scoped, tag = 'scoped memory for tpu_custom_call.1']
    #allocation4 [shape = 's32[2]{0}', space=sflag, size = 0x8, scoped, tag = 'scoped memory for tpu_custom_call.1']
    #allocation5 [shape = 'u8[65536]{0}', space=vmem, size = 0x10000, scoped, tag = 'input window, operand 1, single buffered']
    #allocation6 [shape = 's32[1]{0}', space=sflag, size = 0x4, scoped, tag = 'scoped memory for tpu_custom_call.1']
    #allocation7 [shape = 'u8[65536]{0}', space=vmem, size = 0x10000, scoped, tag = 'input window, operand 3, single buffered']
    #allocation8 [shape = 'u8[65536]{0}', space=vmem, size = 0x10000, scoped, tag = 'output window, operand 0']
    %10 = vsyncpa [#allocation3], 0
    %s11 = scalar_lea.sflag [#allocation3], 1
    %12 = vsyncpa %s11, 0
    %13 = vsyncpa [#allocation6], 0
    %14 = vsyncpa [#allocation4], 0
    %s15 = scalar_lea.sflag [#allocation4], 1
    %16 = vsyncpa %s15, 0
    loop: start=0, step=1, limit=6
    $region2: #{tpu_custom_call.1} parent=1 // loop_pre_header
      _
    $region3: #{tpu_custom_call.1} parent=1 // loop_header
      %s18 = sphi 0, %s22
      %p19 = scmp.ge.s32.totalorder %s18, 6
      %s25 = sphi 0, %s37
      %s26 = sphi 0, %s33
      %s27 = sphi 0, %s25
      %s28 = sphi 0, %s26
      %s29 = sphi 0, %s27
      %s30 = sphi 0, %s28
      %s42 = sphi 0, %s44
      %s45 = sphi 0, %s42
      %s46 = sphi 0, %s45
      %s62 = sphi 0, %s46
      %s66 = sphi 0, %s66
      %s68 = sphi 0, %s66
      %s69 = sphi 0, %s68
      %s83 = sphi 0, %s69
      %s87 = sphi 0, %s87
      %s89 = sphi 0, %s87
      %s90 = sphi 0, %s89
      %s104 = sphi 0, %s90
      %s108 = sphi 0, %s108
      %s110 = sphi 0, %s108
      %s111 = sphi 0, %s110
      %s125 = sphi 0, %s111
      %s129 = sphi 0, %s129
      %s131 = sphi 0, %s129
      %s132 = sphi 0, %s131
      %s146 = sphi 0, %s132
      %s154 = sphi 0, %s156
      %s157 = sphi 0, %s154
      %s158 = sphi 0, %s157
      %s174 = sphi 0, %s158
    $region4: #{tpu_custom_call.1} parent=1 // loop_header_branch
      %21 = sbr.rel (%p19) target = $region8
    $region5: #{tpu_custom_call.1} parent=1 // loop_body
      %s23 = ssub.s32 %s18, 1
      %s24 = ssub.s32 %s18, 2
      %s31 = sadd.s32 1, %s26
      %p32 = scmp.ge.s32.totalorder %s31, 2
      %s33 = scalar_select %p32, 0, %s31
      %s34 = sadd.s32 1, %s25
      %s35 = scalar_select %p32, %s34, %s25
      %p36 = scmp.ge.s32.totalorder %s35, 2
      %s37 = scalar_select %p36, 0, %s35
      %s38 = ssub.s32 %s25, %s37
      %s39 = ssub.s32 %s26, %s33
      %s40 = sor.u32 %s38, %s39
      %p41 = scmp.eq.s32.totalorder %s40, 0
      %s43 = sadd.s32 %s42, 1
      %s44 = scalar_select %p41, %s42, %s43
      %p47 = pneg %p41
      %p48 = scmp.eq.s32.totalorder %s18, 3
      %p49 = por %p47, %p48
      %p50 = scmp.ne.s32.totalorder %s42, %s45
      %p51 = scmp.eq.s32.totalorder %s18, 0
      %p52 = por %p50, %p51
      %p53 = scmp.ne.s32.totalorder %s42, %s45
      %p54 = scmp.eq.s32.totalorder %s23, 3
      %p55 = por %p53, %p54
      %p56 = scmp.ne.s32.totalorder %s45, %s46
      %p57 = scmp.eq.s32.totalorder %s23, 0
      %p58 = por %p56, %p57
      %p59 = scmp.ne.s32.totalorder %s45, %s46
      %p60 = scmp.eq.s32.totalorder %s24, 3
      %p61 = por %p59, %p60
      %p63 = scmp.ne.s32.totalorder %s46, %s62
      %p64 = scmp.eq.s32.totalorder %s24, 0
      %p65 = por %p63, %p64
      %s67 = sadd.s32 %s66, 1
      %p70 = scmp.eq.s32.totalorder %s18, 3
      %p71 = scmp.ne.s32.totalorder %s66, %s68
      %p72 = scmp.eq.s32.totalorder %s18, 0
      %p73 = por %p71, %p72
      %p74 = scmp.ne.s32.totalorder %s66, %s68
      %p75 = scmp.eq.s32.totalorder %s23, 3
      %p76 = por %p74, %p75
      %p77 = scmp.ne.s32.totalorder %s68, %s69
      %p78 = scmp.eq.s32.totalorder %s23, 0
      %p79 = por %p77, %p78
      %p80 = scmp.ne.s32.totalorder %s68, %s69
      %p81 = scmp.eq.s32.totalorder %s24, 3
      %p82 = por %p80, %p81
      %p84 = scmp.ne.s32.totalorder %s69, %s83
      %p85 = scmp.eq.s32.totalorder %s24, 0
      %p86 = por %p84, %p85
      %s88 = sadd.s32 %s87, 1
      %p91 = scmp.eq.s32.totalorder %s18, 3
      %p92 = scmp.ne.s32.totalorder %s87, %s89
      %p93 = scmp.eq.s32.totalorder %s18, 0
      %p94 = por %p92, %p93
      %p95 = scmp.ne.s32.totalorder %s87, %s89
      %p96 = scmp.eq.s32.totalorder %s23, 3
      %p97 = por %p95, %p96
      %p98 = scmp.ne.s32.totalorder %s89, %s90
      %p99 = scmp.eq.s32.totalorder %s23, 0
      %p100 = por %p98, %p99
      %p101 = scmp.ne.s32.totalorder %s89, %s90
      %p102 = scmp.eq.s32.totalorder %s24, 3
      %p103 = por %p101, %p102
      %p105 = scmp.ne.s32.totalorder %s90, %s104
      %p106 = scmp.eq.s32.totalorder %s24, 0
      %p107 = por %p105, %p106
      %s109 = sadd.s32 %s108, 1
      %p112 = scmp.eq.s32.totalorder %s18, 3
      %p113 = scmp.ne.s32.totalorder %s108, %s110
      %p114 = scmp.eq.s32.totalorder %s18, 0
      %p115 = por %p113, %p114
      %p116 = scmp.ne.s32.totalorder %s108, %s110
      %p117 = scmp.eq.s32.totalorder %s23, 3
      %p118 = por %p116, %p117
      %p119 = scmp.ne.s32.totalorder %s110, %s111
      %p120 = scmp.eq.s32.totalorder %s23, 0
      %p121 = por %p119, %p120
      %p122 = scmp.ne.s32.totalorder %s110, %s111
      %p123 = scmp.eq.s32.totalorder %s24, 3
      %p124 = por %p122, %p123
      %p126 = scmp.ne.s32.totalorder %s111, %s125
      %p127 = scmp.eq.s32.totalorder %s24, 0
      %p128 = por %p126, %p127
      %s130 = sadd.s32 %s129, 1
      %p133 = scmp.eq.s32.totalorder %s18, 3
      %p134 = scmp.ne.s32.totalorder %s129, %s131
      %p135 = scmp.eq.s32.totalorder %s18, 0
      %p136 = por %p134, %p135
      %p137 = scmp.ne.s32.totalorder %s129, %s131
      %p138 = scmp.eq.s32.totalorder %s23, 3
      %p139 = por %p137, %p138
      %p140 = scmp.ne.s32.totalorder %s131, %s132
      %p141 = scmp.eq.s32.totalorder %s23, 0
      %p142 = por %p140, %p141
      %p143 = scmp.ne.s32.totalorder %s131, %s132
      %p144 = scmp.eq.s32.totalorder %s24, 3
      %p145 = por %p143, %p144
      %p147 = scmp.ne.s32.totalorder %s132, %s146
      %p148 = scmp.eq.s32.totalorder %s24, 0
      %p149 = por %p147, %p148
      %s150 = ssub.s32 %s25, %s37
      %s151 = ssub.s32 %s26, %s33
      %s152 = sor.u32 %s150, %s151
      %p153 = scmp.eq.s32.totalorder %s152, 0
      %s155 = sadd.s32 %s154, 1
      %s156 = scalar_select %p153, %s154, %s155
      %p159 = pneg %p153
      %p160 = scmp.eq.s32.totalorder %s18, 3
      %p161 = por %p159, %p160
      %p162 = scmp.ne.s32.totalorder %s154, %s157
      %p163 = scmp.eq.s32.totalorder %s18, 0
      %p164 = por %p162, %p163
      %p165 = scmp.ne.s32.totalorder %s154, %s157
      %p166 = scmp.eq.s32.totalorder %s23, 3
      %p167 = por %p165, %p166
      %p168 = scmp.ne.s32.totalorder %s157, %s158
      %p169 = scmp.eq.s32.totalorder %s23, 0
      %p170 = por %p168, %p169
      %p171 = scmp.ne.s32.totalorder %s157, %s158
      %p172 = scmp.eq.s32.totalorder %s24, 3
      %p173 = por %p171, %p172
      %p175 = scmp.ne.s32.totalorder %s158, %s174
      %p176 = scmp.eq.s32.totalorder %s24, 0
      %p177 = por %p175, %p176
      %p178 = scmp.le.s32.totalorder 1, %s18
      %p179 = scmp.lt.s32.totalorder %s18, 5
      %p180 = pnand %p178, %p179
      %p181 = pneg %p180
      // Predicated region
      $region9: #{tpu_custom_call.1} parent=5 // pred_check
        _
      $region10: #{tpu_custom_call.1} parent=5 // pred_check_branch
        %183 = sbr.rel (%p180) target = $region12
      $region11: #{tpu_custom_call.1} parent=5 // pred_region
        %s184 = ssub.s32 %s18, 1
        // Predicated region
        $region13: #{tpu_custom_call.1} parent=11 // pred_check
          %p185 = pneg %p79
        $region14: #{tpu_custom_call.1} parent=11 // pred_check_branch
          %187 = sbr.rel (%p185) target = $region16
        $region15: #{tpu_custom_call.1} parent=11 // pred_region
          %s189 = ssub.s32 2048, 2048
          %190 = vsyncadd [#allocation6], %s189
          %s191 = sshll.u32 [#allocation5], 4
          %s192 = int_to_ptr.vmem [resolvable:$true] %s191
          %197 = dma.hbm_to_vmem [thread:$0]  %s1, 2048, %s192, [#allocation6], 128, 128, 8
        $region16: #{tpu_custom_call.1} parent=11 // pred_fallthru
          _
        // Predicated region
        $region17: #{tpu_custom_call.1} parent=11 // pred_check
          %p198 = pneg %p100
        $region18: #{tpu_custom_call.1} parent=11 // pred_check_branch
          %200 = sbr.rel (%p198) target = $region20
        $region19: #{tpu_custom_call.1} parent=11 // pred_region
          _
        $region20: #{tpu_custom_call.1} parent=11 // pred_fallthru
          _
        // Predicated region
        $region21: #{tpu_custom_call.1} parent=11 // pred_check
          %p201 = pneg %p121
        $region22: #{tpu_custom_call.1} parent=11 // pred_check_branch
          %203 = sbr.rel (%p201) target = $region24
        $region23: #{tpu_custom_call.1} parent=11 // pred_region
          %s205 = ssub.s32 2048, 2048
          %206 = vsyncadd [#allocation6], %s205
          %s207 = sshll.u32 [#allocation7], 4
          %s208 = int_to_ptr.vmem [resolvable:$true] %s207
          %213 = dma.hbm_to_vmem [thread:$0]  %s3, 2048, %s208, [#allocation6], 64, 64, 4
        $region24: #{tpu_custom_call.1} parent=11 // pred_fallthru
          _
        // Predicated region
        $region25: #{tpu_custom_call.1} parent=11 // pred_check
          %p214 = pneg %p142
        $region26: #{tpu_custom_call.1} parent=11 // pred_check_branch
          %216 = sbr.rel (%p214) target = $region28
        $region27: #{tpu_custom_call.1} parent=11 // pred_region
          _
        $region28: #{tpu_custom_call.1} parent=11 // pred_fallthru
          _
      $region12: #{tpu_custom_call.1} parent=5 // pred_fallthru
        _
      %p217 = scmp.lt.s32.totalorder %s18, 4
      // Predicated region
      $region29: #{tpu_custom_call.1} parent=5 // pred_check
        %p218 = pneg %p217
      $region30: #{tpu_custom_call.1} parent=5 // pred_check_branch
        %220 = sbr.rel (%p218) target = $region32
      $region31: #{tpu_custom_call.1} parent=5 // pred_region
        // Predicated region
        $region33: #{tpu_custom_call.1} parent=31 // pred_check
          %p221 = pneg %p52
        $region34: #{tpu_custom_call.1} parent=31 // pred_check_branch
          %223 = sbr.rel (%p221) target = $region36
        $region35: #{tpu_custom_call.1} parent=31 // pred_region
          %s224 = sand.u32 %s42, 1
          %s225 = scalar_lea.sflag [#allocation3], %s224
          %s226 = sand.u32 %s42, 1
          %s227 = smul.addr %s226, 64
          %s228 = scalar_lea.vmem [#allocation2], %s227
          %s229 = smul.u32 16, %s26
          %s231 = ssub.s32 1024, 1024
          %232 = vsyncadd %s225, %s231
          %s233 = smul.addr %s25, 32
          %s234 = sadd.s32 %s229, %s233
          %s235 = smul.addr %s234, 64
          %s236 = scalar_lea.hbm %s0, %s235
          %s237 = sshll.u32 %s228, 4
          %s238 = int_to_ptr.vmem [resolvable:$true] %s237
          %243 = dma.hbm_to_vmem [thread:$0]  %s236, 1024, %s238, %s225, 64, 64, 4
        $region36: #{tpu_custom_call.1} parent=31 // pred_fallthru
          _
      $region32: #{tpu_custom_call.1} parent=5 // pred_fallthru
        _
      %p244 = scmp.le.s32.totalorder 1, %s18
      %p245 = scmp.lt.s32.totalorder %s18, 5
      %p246 = pnand %p244, %p245
      %p247 = pneg %p246
      // Predicated region
      $region37: #{tpu_custom_call.1} parent=5 // pred_check
        _
      $region38: #{tpu_custom_call.1} parent=5 // pred_check_branch
        %249 = sbr.rel (%p246) target = $region40
      $region39: #{tpu_custom_call.1} parent=5 // pred_region
        %s250 = ssub.s32 %s18, 1
        %s251 = sand.u32 %s45, 1
        %s252 = scalar_lea.sflag [#allocation3], %s251
        %s253 = sand.u32 %s45, 1
        %s254 = smul.addr %s253, 64
        %s255 = scalar_lea.vmem [#allocation2], %s254
        // Predicated region
        $region41: #{tpu_custom_call.1} parent=39 // pred_check
          %p256 = pneg %p58
        $region42: #{tpu_custom_call.1} parent=39 // pred_check_branch
          %258 = sbr.rel (%p256) target = $region44
        $region43: #{tpu_custom_call.1} parent=39 // pred_region
          %259 = dma.done %s252, 1024
        $region44: #{tpu_custom_call.1} parent=39 // pred_fallthru
          _
        // Predicated region
        $region45: #{tpu_custom_call.1} parent=39 // pred_check
          %p260 = pneg %p79
        $region46: #{tpu_custom_call.1} parent=39 // pred_check_branch
          %262 = sbr.rel (%p260) target = $region48
        $region47: #{tpu_custom_call.1} parent=39 // pred_region
          %263 = dma.done [#allocation6], 2048
        $region48: #{tpu_custom_call.1} parent=39 // pred_fallthru
          _
        // Predicated region
        $region49: #{tpu_custom_call.1} parent=39 // pred_check
          %p264 = pneg %p121
        $region50: #{tpu_custom_call.1} parent=39 // pred_check_branch
          %266 = sbr.rel (%p264) target = $region52
        $region51: #{tpu_custom_call.1} parent=39 // pred_region
          %267 = dma.done [#allocation6], 2048
        $region52: #{tpu_custom_call.1} parent=39 // pred_fallthru
          _
        %s268 = sand.u32 %s45, 1
        %s269 = scalar_lea.sflag [#allocation3], %s268
        %s270 = sand.u32 %s45, 1
        %s271 = smul.addr %s270, 64
        %s272 = scalar_lea.vmem [#allocation2], %s271
        %p273 = pneg %p58
        %p274 = pneg %p55
        %p275 = pneg %p79
        %p276 = pneg %p76
        %p277 = pneg %p100
        %p278 = pneg %p97
        %p279 = pneg %p121
        %p280 = pneg %p118
        %p281 = pneg %p142
        %p282 = pneg %p139
        %p283 = pneg %p170
        %p284 = pneg %p167
        %s285 = sand.u32 %s157, 1
        %s286 = scalar_lea.sflag [#allocation4], %s285
        %s287 = sand.u32 %s157, 1
        %s288 = smul.addr %s287, 64
        %s289 = scalar_lea.vmem [#allocation8], %s288
        %s290 = smul.u32 16, %s28
        %s291 = smul.u32 16, %s28
        %v293 = vld [vmem:[%s255] sm:$0xf]
        %v294 = vld [vmem:[%s255 + $0x4] sm:$0xf]
        %v295 = vld [vmem:[%s255 + $0x8] sm:$0xf]
        %v296 = vld [vmem:[%s255 + $0xc] sm:$0xf]
        %v297 = vld [vmem:[%s255 + $0x10] sm:$0xf]
        %v298 = vld [vmem:[%s255 + $0x14] sm:$0xf]
        %v299 = vld [vmem:[%s255 + $0x18] sm:$0xf]
        %v300 = vld [vmem:[%s255 + $0x1c] sm:$0xf]
        %v301 = vld [vmem:[%s255 + $0x20] sm:$0xf]
        %v302 = vld [vmem:[%s255 + $0x24] sm:$0xf]
        %v303 = vld [vmem:[%s255 + $0x28] sm:$0xf]
        %v304 = vld [vmem:[%s255 + $0x2c] sm:$0xf]
        %v305 = vld [vmem:[%s255 + $0x30] sm:$0xf]
        %v306 = vld [vmem:[%s255 + $0x34] sm:$0xf]
        %v307 = vld [vmem:[%s255 + $0x38] sm:$0xf]
        %v308 = vld [vmem:[%s255 + $0x3c] sm:$0xf]
        %v309 = vld [vmem:[#allocation5] sm:$0xff]
        %v310 = vld [vmem:[#allocation5 + $0x8] sm:$0xff]
        %v311 = vld [vmem:[#allocation5 + $0x10] sm:$0xff]
        %v312 = vld [vmem:[#allocation5 + $0x18] sm:$0xff]
        %v313 = vld [vmem:[#allocation5 + $0x20] sm:$0xff]
        %v314 = vld [vmem:[#allocation5 + $0x28] sm:$0xff]
        %v315 = vld [vmem:[#allocation5 + $0x30] sm:$0xff]
        %v316 = vld [vmem:[#allocation5 + $0x38] sm:$0xff]
        %v317 = vld [vmem:[#allocation5 + $0x40] sm:$0xff]
        %v318 = vld [vmem:[#allocation5 + $0x48] sm:$0xff]
        %v319 = vld [vmem:[#allocation5 + $0x50] sm:$0xff]
        %v320 = vld [vmem:[#allocation5 + $0x58] sm:$0xff]
        %v321 = vld [vmem:[#allocation5 + $0x60] sm:$0xff]
        %v322 = vld [vmem:[#allocation5 + $0x68] sm:$0xff]
        %v323 = vld [vmem:[#allocation5 + $0x70] sm:$0xff]
        %v324 = vld [vmem:[#allocation5 + $0x78] sm:$0xff]
        %v325 = vld [vmem:[%s2] sm:$0x3]
        %v327 = vlaneseq
        %v328 = vshrl.u32 %v327, 7
        %v329 = vsub.s32 0, %v328
        %v330 = vrot.slane %v325, %v329
        %v331 = vlaneseq
        %v332 = vshrl.u32 %v331, 7
        %v333 = vsub.s32 1, %v332
        %v334 = vrot.slane %v325, %v333
        %v353 = vunpack.c.l.b16 %v293
        %v354 = vunpack.c.l.b16 %v294
        %v355 = vunpack.c.l.b16 %v295
        %v356 = vunpack.c.l.b16 %v296
        %v357 = vunpack.c.l.b16 %v297
        %v358 = vunpack.c.l.b16 %v298
        %v359 = vunpack.c.l.b16 %v299
        %v360 = vunpack.c.l.b16 %v300
        %v361 = vunpack.c.l.b16 %v301
        %v362 = vunpack.c.l.b16 %v302
        %v363 = vunpack.c.l.b16 %v303
        %v364 = vunpack.c.l.b16 %v304
        %v365 = vunpack.c.l.b16 %v305
        %v366 = vunpack.c.l.b16 %v306
        %v367 = vunpack.c.l.b16 %v307
        %v368 = vunpack.c.l.b16 %v308
        %v369 = vpack.c.b16 %v354, %v353
        %v370 = vpack.c.b16 %v356, %v355
        %v371 = vpack.c.b16 %v358, %v357
        %v372 = vpack.c.b16 %v360, %v359
        %v373 = vpack.c.b16 %v362, %v361
        %v374 = vpack.c.b16 %v364, %v363
        %v375 = vpack.c.b16 %v366, %v365
        %v376 = vpack.c.b16 %v368, %v367
        %v401 = vunpack.c.l.b16 %v309
        %v402 = vunpack.c.h.b16 %v309
        %v403 = vunpack.c.l.b16 %v310
        %v404 = vunpack.c.h.b16 %v310
        %v405 = vunpack.c.l.b16 %v311
        %v406 = vunpack.c.h.b16 %v311
        %v407 = vunpack.c.l.b16 %v312
        %v408 = vunpack.c.h.b16 %v312
        %v409 = vunpack.c.l.b16 %v313
        %v410 = vunpack.c.h.b16 %v313
        %v411 = vunpack.c.l.b16 %v314
        %v412 = vunpack.c.h.b16 %v314
        %v413 = vunpack.c.l.b16 %v315
        %v414 = vunpack.c.h.b16 %v315
        %v415 = vunpack.c.l.b16 %v316
        %v416 = vunpack.c.h.b16 %v316
        %v417 = vunpack.c.l.b16 %v317
        %v418 = vunpack.c.h.b16 %v317
        %v419 = vunpack.c.l.b16 %v318
        %v420 = vunpack.c.h.b16 %v318
        %v421 = vunpack.c.l.b16 %v319
        %v422 = vunpack.c.h.b16 %v319
        %v423 = vunpack.c.l.b16 %v320
        %v424 = vunpack.c.h.b16 %v320
        %v425 = vunpack.c.l.b16 %v321
        %v426 = vunpack.c.h.b16 %v321
        %v427 = vunpack.c.l.b16 %v322
        %v428 = vunpack.c.h.b16 %v322
        %v429 = vunpack.c.l.b16 %v323
        %v430 = vunpack.c.h.b16 %v323
        %v431 = vunpack.c.l.b16 %v324
        %v432 = vunpack.c.h.b16 %v324
        %v433 = vpack.c.b16 %v403, %v401
        %v434 = vpack.c.b16 %v404, %v402
        %v435 = vpack.c.b16 %v407, %v405
        %v436 = vpack.c.b16 %v408, %v406
        %v437 = vpack.c.b16 %v411, %v409
        %v438 = vpack.c.b16 %v412, %v410
        %v439 = vpack.c.b16 %v415, %v413
        %v440 = vpack.c.b16 %v416, %v414
        %v441 = vpack.c.b16 %v419, %v417
        %v442 = vpack.c.b16 %v420, %v418
        %v443 = vpack.c.b16 %v423, %v421
        %v444 = vpack.c.b16 %v424, %v422
        %v445 = vpack.c.b16 %v427, %v425
        %v446 = vpack.c.b16 %v428, %v426
        %v447 = vpack.c.b16 %v431, %v429
        %v448 = vpack.c.b16 %v432, %v430
        %465 = vmatprep.subr.bf16.mxu0 %v448
        %466 = vmatpush1.bf16.msra.mxu0 %v447
        %467 = vmatprep.subr.bf16.mxu0 %v446
        %468 = vmatpush1.bf16.msra.mxu0 %v445
        %469 = vmatprep.subr.bf16.mxu0 %v444
        %470 = vmatpush1.bf16.msra.mxu0 %v443
        %471 = vmatprep.subr.bf16.mxu0 %v442
        %472 = vmatpush1.bf16.msra.mxu0 %v441
        %473 = vmatprep.subr.bf16.mxu0 %v440
        %474 = vmatpush1.bf16.msra.mxu0 %v439
        %475 = vmatprep.subr.bf16.mxu0 %v438
        %476 = vmatpush1.bf16.msra.mxu0 %v437
        %477 = vmatprep.subr.bf16.mxu0 %v436
        %478 = vmatpush1.bf16.msra.mxu0 %v435
        %479 = vmatprep.subr.bf16.mxu0 %v434
        %480 = vmatpush1.bf16.msra.mxu0 %v433
        %481 = vmatprep.subr.bf16.mxu0 0
        %482 = vmatpush2.bf16.msra.mxu0 0
        %483 = vmatprep.subr.bf16.mxu0 0
        %484 = vmatpush2.bf16.msra.mxu0 0
        %485 = vmatprep.subr.bf16.mxu0 0
        %486 = vmatpush2.bf16.msra.mxu0 0
        %487 = vmatprep.subr.bf16.mxu0 0
        %488 = vmatpush2.bf16.msra.mxu0 0
        %489 = vmatprep.subr.bf16.mxu0 0
        %490 = vmatpush2.bf16.msra.mxu0 0
        %491 = vmatprep.subr.bf16.mxu0 0
        %492 = vmatpush2.bf16.msra.mxu0 0
        %493 = vmatprep.subr.bf16.mxu0 0
        %494 = vmatpush2.bf16.msra.mxu0 0
        %495 = vmatprep.subr.bf16.mxu0 0
        %496 = vmatpush2.bf16.msra.mxu0 0
        %497 = vmatprep.mubr.bf16.mxu0 0
        %498 = vmatmul.mubr.bf16.gmra.mxu0 %v369
        %v499 = vpop.f32.mrf.mxu0
        %v500 = vadd.f32 %v330, %v499
        %v501 = vpop.f32.mrf.mxu0
        %v502 = vadd.f32 %v334, %v501
        %v503 = vpop.f32.mrf.mxu0
        %v504 = vadd.f32 %v330, %v503
        %v505 = vpop.f32.mrf.mxu0
        %v506 = vadd.f32 %v334, %v505
        %507 = vmatprep.mubr.bf16.mxu0 0
        %508 = vmatmul.mubr.bf16.gmra.mxu0 %v370
        %v509 = vpop.f32.mrf.mxu0
        %v510 = vadd.f32 %v330, %v509
        %v511 = vpop.f32.mrf.mxu0
        %v512 = vadd.f32 %v334, %v511
        %v513 = vpop.f32.mrf.mxu0
        %v514 = vadd.f32 %v330, %v513
        %v515 = vpop.f32.mrf.mxu0
        %v516 = vadd.f32 %v334, %v515
        %517 = vmatprep.mubr.bf16.mxu0 0
        %518 = vmatmul.mubr.bf16.gmra.mxu0 %v371
        %v519 = vpop.f32.mrf.mxu0
        %v520 = vadd.f32 %v330, %v519
        %v521 = vpop.f32.mrf.mxu0
        %v522 = vadd.f32 %v334, %v521
        %v523 = vpop.f32.mrf.mxu0
        %v524 = vadd.f32 %v330, %v523
        %v525 = vpop.f32.mrf.mxu0
        %v526 = vadd.f32 %v334, %v525
        %527 = vmatprep.mubr.bf16.mxu0 0
        %528 = vmatmul.mubr.bf16.gmra.mxu0 %v372
        %v529 = vpop.f32.mrf.mxu0
        %v530 = vadd.f32 %v330, %v529
        %v531 = vpop.f32.mrf.mxu0
        %v532 = vadd.f32 %v334, %v531
        %v533 = vpop.f32.mrf.mxu0
        %v534 = vadd.f32 %v330, %v533
        %v535 = vpop.f32.mrf.mxu0
        %v536 = vadd.f32 %v334, %v535
        %537 = vmatprep.mubr.bf16.mxu0 0
        %538 = vmatmul.mubr.bf16.gmra.mxu0 %v373
        %v539 = vpop.f32.mrf.mxu0
        %v540 = vadd.f32 %v330, %v539
        %v541 = vpop.f32.mrf.mxu0
        %v542 = vadd.f32 %v334, %v541
        %v543 = vpop.f32.mrf.mxu0
        %v544 = vadd.f32 %v330, %v543
        %v545 = vpop.f32.mrf.mxu0
        %v546 = vadd.f32 %v334, %v545
        %547 = vmatprep.mubr.bf16.mxu0 0
        %548 = vmatmul.mubr.bf16.gmra.mxu0 %v374
        %v549 = vpop.f32.mrf.mxu0
        %v550 = vadd.f32 %v330, %v549
        %v551 = vpop.f32.mrf.mxu0
        %v552 = vadd.f32 %v334, %v551
        %v553 = vpop.f32.mrf.mxu0
        %v554 = vadd.f32 %v330, %v553
        %v555 = vpop.f32.mrf.mxu0
        %v556 = vadd.f32 %v334, %v555
        %557 = vmatprep.mubr.bf16.mxu0 0
        %558 = vmatmul.mubr.bf16.gmra.mxu0 %v375
        %v559 = vpop.f32.mrf.mxu0
        %v560 = vadd.f32 %v330, %v559
        %v561 = vpop.f32.mrf.mxu0
        %v562 = vadd.f32 %v334, %v561
        %v563 = vpop.f32.mrf.mxu0
        %v564 = vadd.f32 %v330, %v563
        %v565 = vpop.f32.mrf.mxu0
        %v566 = vadd.f32 %v334, %v565
        %567 = vmatprep.mubr.bf16.mxu0 0
        %568 = vmatmul.mubr.bf16.gmra.mxu0 %v376
        %v569 = vpop.f32.mrf.mxu0
        %v570 = vadd.f32 %v330, %v569
        %v571 = vpop.f32.mrf.mxu0
        %v572 = vadd.f32 %v334, %v571
        %v573 = vpop.f32.mrf.mxu0
        %v574 = vadd.f32 %v330, %v573
        %v575 = vpop.f32.mrf.mxu0
        %v576 = vadd.f32 %v334, %v575
        %577 = vdwg.mxu0
        %v578 = vmax.f32 %v500, 0.0
        %v579 = vmax.f32 %v502, 0.0
        %v580 = vmax.f32 %v504, 0.0
        %v581 = vmax.f32 %v506, 0.0
        %v582 = vmax.f32 %v510, 0.0
        %v583 = vmax.f32 %v512, 0.0
        %v584 = vmax.f32 %v514, 0.0
        %v585 = vmax.f32 %v516, 0.0
        %v586 = vmax.f32 %v520, 0.0
        %v587 = vmax.f32 %v522, 0.0
        %v588 = vmax.f32 %v524, 0.0
        %v589 = vmax.f32 %v526, 0.0
        %v590 = vmax.f32 %v530, 0.0
        %v591 = vmax.f32 %v532, 0.0
        %v592 = vmax.f32 %v534, 0.0
        %v593 = vmax.f32 %v536, 0.0
        %v594 = vmax.f32 %v540, 0.0
        %v595 = vmax.f32 %v542, 0.0
        %v596 = vmax.f32 %v544, 0.0
        %v597 = vmax.f32 %v546, 0.0
        %v598 = vmax.f32 %v550, 0.0
        %v599 = vmax.f32 %v552, 0.0
        %v600 = vmax.f32 %v554, 0.0
        %v601 = vmax.f32 %v556, 0.0
        %v602 = vmax.f32 %v560, 0.0
        %v603 = vmax.f32 %v562, 0.0
        %v604 = vmax.f32 %v564, 0.0
        %v605 = vmax.f32 %v566, 0.0
        %v606 = vmax.f32 %v570, 0.0
        %v607 = vmax.f32 %v572, 0.0
        %v608 = vmax.f32 %v574, 0.0
        %v609 = vmax.f32 %v576, 0.0
        %v610 = vpack.c.bf16 %v580, %v578
        %v611 = vpack.c.bf16 %v581, %v579
        %v612 = vpack.c.bf16 %v584, %v582
        %v613 = vpack.c.bf16 %v585, %v583
        %v614 = vpack.c.bf16 %v588, %v586
        %v615 = vpack.c.bf16 %v589, %v587
        %v616 = vpack.c.bf16 %v592, %v590
        %v617 = vpack.c.bf16 %v593, %v591
        %v618 = vpack.c.bf16 %v596, %v594
        %v619 = vpack.c.bf16 %v597, %v595
        %v620 = vpack.c.bf16 %v600, %v598
        %v621 = vpack.c.bf16 %v601, %v599
        %v622 = vpack.c.bf16 %v604, %v602
        %v623 = vpack.c.bf16 %v605, %v603
        %v624 = vpack.c.bf16 %v608, %v606
        %v625 = vpack.c.bf16 %v609, %v607
        %v626 = vld [vmem:[#allocation7] sm:$0xf]
        %v627 = vld [vmem:[#allocation7 + $0x4] sm:$0xf]
        %v628 = vld [vmem:[#allocation7 + $0x8] sm:$0xf]
        %v629 = vld [vmem:[#allocation7 + $0xc] sm:$0xf]
        %v630 = vld [vmem:[#allocation7 + $0x10] sm:$0xf]
        %v631 = vld [vmem:[#allocation7 + $0x14] sm:$0xf]
        %v632 = vld [vmem:[#allocation7 + $0x18] sm:$0xf]
        %v633 = vld [vmem:[#allocation7 + $0x1c] sm:$0xf]
        %v634 = vld [vmem:[#allocation7 + $0x20] sm:$0xf]
        %v635 = vld [vmem:[#allocation7 + $0x24] sm:$0xf]
        %v636 = vld [vmem:[#allocation7 + $0x28] sm:$0xf]
        %v637 = vld [vmem:[#allocation7 + $0x2c] sm:$0xf]
        %v638 = vld [vmem:[#allocation7 + $0x30] sm:$0xf]
        %v639 = vld [vmem:[#allocation7 + $0x34] sm:$0xf]
        %v640 = vld [vmem:[#allocation7 + $0x38] sm:$0xf]
        %v641 = vld [vmem:[#allocation7 + $0x3c] sm:$0xf]
        %v642 = vld [vmem:[#allocation7 + $0x40] sm:$0xf]
        %v643 = vld [vmem:[#allocation7 + $0x44] sm:$0xf]
        %v644 = vld [vmem:[#allocation7 + $0x48] sm:$0xf]
        %v645 = vld [vmem:[#allocation7 + $0x4c] sm:$0xf]
        %v646 = vld [vmem:[#allocation7 + $0x50] sm:$0xf]
        %v647 = vld [vmem:[#allocation7 + $0x54] sm:$0xf]
        %v648 = vld [vmem:[#allocation7 + $0x58] sm:$0xf]
        %v649 = vld [vmem:[#allocation7 + $0x5c] sm:$0xf]
        %v650 = vld [vmem:[#allocation7 + $0x60] sm:$0xf]
        %v651 = vld [vmem:[#allocation7 + $0x64] sm:$0xf]
        %v652 = vld [vmem:[#allocation7 + $0x68] sm:$0xf]
        %v653 = vld [vmem:[#allocation7 + $0x6c] sm:$0xf]
        %v654 = vld [vmem:[#allocation7 + $0x70] sm:$0xf]
        %v655 = vld [vmem:[#allocation7 + $0x74] sm:$0xf]
        %v656 = vld [vmem:[#allocation7 + $0x78] sm:$0xf]
        %v657 = vld [vmem:[#allocation7 + $0x7c] sm:$0xf]
        %v658 = vld [vmem:[%s4] sm:$0x1]
        %v660 = vlaneseq
        %v661 = vshrl.u32 %v660, 7
        %v662 = vsub.s32 0, %v661
        %v663 = vrot.slane %v658, %v662
        %v697 = vunpack.c.l.b16 %v626
        %v698 = vunpack.c.l.b16 %v627
        %v699 = vunpack.c.l.b16 %v628
        %v700 = vunpack.c.l.b16 %v629
        %v701 = vunpack.c.l.b16 %v630
        %v702 = vunpack.c.l.b16 %v631
        %v703 = vunpack.c.l.b16 %v632
        %v704 = vunpack.c.l.b16 %v633
        %v705 = vunpack.c.l.b16 %v634
        %v706 = vunpack.c.l.b16 %v635
        %v707 = vunpack.c.l.b16 %v636
        %v708 = vunpack.c.l.b16 %v637
        %v709 = vunpack.c.l.b16 %v638
        %v710 = vunpack.c.l.b16 %v639
        %v711 = vunpack.c.l.b16 %v640
        %v712 = vunpack.c.l.b16 %v641
        %v713 = vunpack.c.l.b16 %v642
        %v714 = vunpack.c.l.b16 %v643
        %v715 = vunpack.c.l.b16 %v644
        %v716 = vunpack.c.l.b16 %v645
        %v717 = vunpack.c.l.b16 %v646
        %v718 = vunpack.c.l.b16 %v647
        %v719 = vunpack.c.l.b16 %v648
        %v720 = vunpack.c.l.b16 %v649
        %v721 = vunpack.c.l.b16 %v650
        %v722 = vunpack.c.l.b16 %v651
        %v723 = vunpack.c.l.b16 %v652
        %v724 = vunpack.c.l.b16 %v653
        %v725 = vunpack.c.l.b16 %v654
        %v726 = vunpack.c.l.b16 %v655
        %v727 = vunpack.c.l.b16 %v656
        %v728 = vunpack.c.l.b16 %v657
        %v729 = vpack.c.b16 %v698, %v697
        %v730 = vpack.c.b16 %v700, %v699
        %v731 = vpack.c.b16 %v702, %v701
        %v732 = vpack.c.b16 %v704, %v703
        %v733 = vpack.c.b16 %v706, %v705
        %v734 = vpack.c.b16 %v708, %v707
        %v735 = vpack.c.b16 %v710, %v709
        %v736 = vpack.c.b16 %v712, %v711
        %v737 = vpack.c.b16 %v714, %v713
        %v738 = vpack.c.b16 %v716, %v715
        %v739 = vpack.c.b16 %v718, %v717
        %v740 = vpack.c.b16 %v720, %v719
        %v741 = vpack.c.b16 %v722, %v721
        %v742 = vpack.c.b16 %v724, %v723
        %v743 = vpack.c.b16 %v726, %v725
        %v744 = vpack.c.b16 %v728, %v727
        %761 = vmatprep.subr.bf16.mxu0 0
        %762 = vmatpush1.bf16.msra.mxu0 %v736
        %763 = vmatprep.subr.bf16.mxu0 0
        %764 = vmatpush1.bf16.msra.mxu0 %v735
        %765 = vmatprep.subr.bf16.mxu0 0
        %766 = vmatpush1.bf16.msra.mxu0 %v734
        %767 = vmatprep.subr.bf16.mxu0 0
        %768 = vmatpush1.bf16.msra.mxu0 %v733
        %769 = vmatprep.subr.bf16.mxu0 0
        %770 = vmatpush1.bf16.msra.mxu0 %v732
        %771 = vmatprep.subr.bf16.mxu0 0
        %772 = vmatpush1.bf16.msra.mxu0 %v731
        %773 = vmatprep.subr.bf16.mxu0 0
        %774 = vmatpush1.bf16.msra.mxu0 %v730
        %775 = vmatprep.subr.bf16.mxu0 0
        %776 = vmatpush1.bf16.msra.mxu0 %v729
        %777 = vmatprep.subr.bf16.mxu0 0
        %778 = vmatpush2.bf16.msra.mxu0 %v744
        %779 = vmatprep.subr.bf16.mxu0 0
        %780 = vmatpush2.bf16.msra.mxu0 %v743
        %781 = vmatprep.subr.bf16.mxu0 0
        %782 = vmatpush2.bf16.msra.mxu0 %v742
        %783 = vmatprep.subr.bf16.mxu0 0
        %784 = vmatpush2.bf16.msra.mxu0 %v741
        %785 = vmatprep.subr.bf16.mxu0 0
        %786 = vmatpush2.bf16.msra.mxu0 %v740
        %787 = vmatprep.subr.bf16.mxu0 0
        %788 = vmatpush2.bf16.msra.mxu0 %v739
        %789 = vmatprep.subr.bf16.mxu0 0
        %790 = vmatpush2.bf16.msra.mxu0 %v738
        %791 = vmatprep.subr.bf16.mxu0 0
        %792 = vmatpush2.bf16.msra.mxu0 %v737
        %793 = vmatprep.mubr.bf16.mxu0 %v611
        %794 = vmatmul.mubr.bf16.gmra.mxu0 %v610
        %v795 = vpop.f32.mrf.mxu0
        %v796 = vadd.f32 %v663, %v795
        %v797 = vpop.f32.mrf.mxu0
        %v798 = vpop.f32.mrf.mxu0
        %v799 = vadd.f32 %v663, %v798
        %v800 = vpop.f32.mrf.mxu0
        %801 = vmatprep.mubr.bf16.mxu0 %v613
        %802 = vmatmul.mubr.bf16.gmra.mxu0 %v612
        %v803 = vpop.f32.mrf.mxu0
        %v804 = vadd.f32 %v663, %v803
        %v805 = vpop.f32.mrf.mxu0
        %v806 = vpop.f32.mrf.mxu0
        %v807 = vadd.f32 %v663, %v806
        %v808 = vpop.f32.mrf.mxu0
        %809 = vmatprep.mubr.bf16.mxu0 %v615
        %810 = vmatmul.mubr.bf16.gmra.mxu0 %v614
        %v811 = vpop.f32.mrf.mxu0
        %v812 = vadd.f32 %v663, %v811
        %v813 = vpop.f32.mrf.mxu0
        %v814 = vpop.f32.mrf.mxu0
        %v815 = vadd.f32 %v663, %v814
        %v816 = vpop.f32.mrf.mxu0
        %817 = vmatprep.mubr.bf16.mxu0 %v617
        %818 = vmatmul.mubr.bf16.gmra.mxu0 %v616
        %v819 = vpop.f32.mrf.mxu0
        %v820 = vadd.f32 %v663, %v819
        %v821 = vpop.f32.mrf.mxu0
        %v822 = vpop.f32.mrf.mxu0
        %v823 = vadd.f32 %v663, %v822
        %v824 = vpop.f32.mrf.mxu0
        %825 = vmatprep.mubr.bf16.mxu0 %v619
        %826 = vmatmul.mubr.bf16.gmra.mxu0 %v618
        %v827 = vpop.f32.mrf.mxu0
        %v828 = vadd.f32 %v663, %v827
        %v829 = vpop.f32.mrf.mxu0
        %v830 = vpop.f32.mrf.mxu0
        %v831 = vadd.f32 %v663, %v830
        %v832 = vpop.f32.mrf.mxu0
        %833 = vmatprep.mubr.bf16.mxu0 %v621
        %834 = vmatmul.mubr.bf16.gmra.mxu0 %v620
        %v835 = vpop.f32.mrf.mxu0
        %v836 = vadd.f32 %v663, %v835
        %v837 = vpop.f32.mrf.mxu0
        %v838 = vpop.f32.mrf.mxu0
        %v839 = vadd.f32 %v663, %v838
        %v840 = vpop.f32.mrf.mxu0
        %841 = vmatprep.mubr.bf16.mxu0 %v623
        %842 = vmatmul.mubr.bf16.gmra.mxu0 %v622
        %v843 = vpop.f32.mrf.mxu0
        %v844 = vadd.f32 %v663, %v843
        %v845 = vpop.f32.mrf.mxu0
        %v846 = vpop.f32.mrf.mxu0
        %v847 = vadd.f32 %v663, %v846
        %v848 = vpop.f32.mrf.mxu0
        %849 = vmatprep.mubr.bf16.mxu0 %v625
        %850 = vmatmul.mubr.bf16.gmra.mxu0 %v624
        %v851 = vpop.f32.mrf.mxu0
        %v852 = vadd.f32 %v663, %v851
        %v853 = vpop.f32.mrf.mxu0
        %v854 = vpop.f32.mrf.mxu0
        %v855 = vadd.f32 %v663, %v854
        %v856 = vpop.f32.mrf.mxu0
        %857 = vdwg.mxu0
        %v858 = vpack.c.bf16 %v799, %v796
        %v859 = vpack.c.bf16 %v807, %v804
        %v860 = vpack.c.bf16 %v815, %v812
        %v861 = vpack.c.bf16 %v823, %v820
        %v862 = vpack.c.bf16 %v831, %v828
        %v863 = vpack.c.bf16 %v839, %v836
        %v864 = vpack.c.bf16 %v847, %v844
        %v865 = vpack.c.bf16 %v855, %v852
        %v874 = vunpack.c.l.b16 %v858
        %v875 = vunpack.c.h.b16 %v858
        %v876 = vunpack.c.l.b16 %v859
        %v877 = vunpack.c.h.b16 %v859
        %v878 = vunpack.c.l.b16 %v860
        %v879 = vunpack.c.h.b16 %v860
        %v880 = vunpack.c.l.b16 %v861
        %v881 = vunpack.c.h.b16 %v861
        %v882 = vunpack.c.l.b16 %v862
        %v883 = vunpack.c.h.b16 %v862
        %v884 = vunpack.c.l.b16 %v863
        %v885 = vunpack.c.h.b16 %v863
        %v886 = vunpack.c.l.b16 %v864
        %v887 = vunpack.c.h.b16 %v864
        %v888 = vunpack.c.l.b16 %v865
        %v889 = vunpack.c.h.b16 %v865
        %v890 = vpack.c.b16 %v874, %v874
        %v891 = vpack.c.b16 %v875, %v875
        %v892 = vpack.c.b16 %v876, %v876
        %v893 = vpack.c.b16 %v877, %v877
        %v894 = vpack.c.b16 %v878, %v878
        %v895 = vpack.c.b16 %v879, %v879
        %v896 = vpack.c.b16 %v880, %v880
        %v897 = vpack.c.b16 %v881, %v881
        %v898 = vpack.c.b16 %v882, %v882
        %v899 = vpack.c.b16 %v883, %v883
        %v900 = vpack.c.b16 %v884, %v884
        %v901 = vpack.c.b16 %v885, %v885
        %v902 = vpack.c.b16 %v886, %v886
        %v903 = vpack.c.b16 %v887, %v887
        %v904 = vpack.c.b16 %v888, %v888
        %v905 = vpack.c.b16 %v889, %v889
        %922 = vst [vmem:[%s289] sm:$0xf] %v890
        %923 = vst [vmem:[%s289 + $0x4] sm:$0xf] %v891
        %924 = vst [vmem:[%s289 + $0x8] sm:$0xf] %v892
        %925 = vst [vmem:[%s289 + $0xc] sm:$0xf] %v893
        %926 = vst [vmem:[%s289 + $0x10] sm:$0xf] %v894
        %927 = vst [vmem:[%s289 + $0x14] sm:$0xf] %v895
        %928 = vst [vmem:[%s289 + $0x18] sm:$0xf] %v896
        %929 = vst [vmem:[%s289 + $0x1c] sm:$0xf] %v897
        %930 = vst [vmem:[%s289 + $0x20] sm:$0xf] %v898
        %931 = vst [vmem:[%s289 + $0x24] sm:$0xf] %v899
        %932 = vst [vmem:[%s289 + $0x28] sm:$0xf] %v900
        %933 = vst [vmem:[%s289 + $0x2c] sm:$0xf] %v901
        %934 = vst [vmem:[%s289 + $0x30] sm:$0xf] %v902
        %935 = vst [vmem:[%s289 + $0x34] sm:$0xf] %v903
        %936 = vst [vmem:[%s289 + $0x38] sm:$0xf] %v904
        %937 = vst [vmem:[%s289 + $0x3c] sm:$0xf] %v905
        %s938 = sand.u32 %s157, 1
        %s939 = scalar_lea.sflag [#allocation4], %s938
        %s940 = sand.u32 %s157, 1
        %s941 = smul.addr %s940, 64
        %s942 = scalar_lea.vmem [#allocation8], %s941
        // Predicated region
        $region53: #{tpu_custom_call.1} parent=39 // pred_check
          %p943 = pneg %p167
        $region54: #{tpu_custom_call.1} parent=39 // pred_check_branch
          %945 = sbr.rel (%p943) target = $region56
        $region55: #{tpu_custom_call.1} parent=39 // pred_region
          %s946 = smul.u32 16, %s28
          %s948 = ssub.s32 1024, 1024
          %949 = vsyncadd %s939, %s948
          %s950 = smul.addr %s27, 32
          %s951 = sadd.s32 %s946, %s950
          %s952 = smul.addr %s951, 64
          %s953 = scalar_lea.hbm %s5, %s952
          %s954 = sshll.u32 %s942, 4
          %s955 = int_to_ptr.vmem [resolvable:$true] %s954
          %960 = dma.vmem_to_hbm [thread:$0]  %s955, 1024, %s953, %s939, 64, 64, 4
        $region56: #{tpu_custom_call.1} parent=39 // pred_fallthru
          _
      $region40: #{tpu_custom_call.1} parent=5 // pred_fallthru
        _
      %p961 = scmp.le.s32.totalorder 2, %s18
      // Predicated region
      $region57: #{tpu_custom_call.1} parent=5 // pred_check
        %p962 = pneg %p961
      $region58: #{tpu_custom_call.1} parent=5 // pred_check_branch
        %964 = sbr.rel (%p962) target = $region60
      $region59: #{tpu_custom_call.1} parent=5 // pred_region
        %s965 = ssub.s32 %s18, 2
        // Predicated region
        $region61: #{tpu_custom_call.1} parent=59 // pred_check
          %p966 = pneg %p173
        $region62: #{tpu_custom_call.1} parent=59 // pred_check_branch
          %968 = sbr.rel (%p966) target = $region64
        $region63: #{tpu_custom_call.1} parent=59 // pred_region
          %s969 = sand.u32 %s158, 1
          %s970 = scalar_lea.sflag [#allocation4], %s969
          %s971 = sand.u32 %s158, 1
          %s972 = smul.addr %s971, 64
          %s973 = scalar_lea.vmem [#allocation8], %s972
          %974 = dma.done %s970, 1024
        $region64: #{tpu_custom_call.1} parent=59 // pred_fallthru
          _
      $region60: #{tpu_custom_call.1} parent=5 // pred_fallthru
        _
    $region6: #{tpu_custom_call.1} parent=1 // loop_footer
      %s22 = sadd.s32 1, %s18
    $region7: #{tpu_custom_call.1} parent=1 // loop_footer_branch
      %17 = sbr.rel target = $region3
    $region8: #{tpu_custom_call.1} parent=1 // loop_exit
      _
    %975 = vsyncpa [#allocation3], 1
    %s976 = scalar_lea.sflag [#allocation3], 1
    %977 = vsyncpa %s976, 1
    %978 = vsyncpa [#allocation6], 1
    %979 = vsyncpa [#allocation4], 1
    %s980 = scalar_lea.sflag [#allocation4], 1
    %981 = vsyncpa %s980, 1

</llo_original>
